<compile_context>
chip_gen: v5e
topology: v5e:2x2
jax: 0.10.0
libtpu: 0.0.40
codegen_flags: <defaults>
</compile_context>

<pallas_src>
import functools

import jax
import jax.numpy as jnp
from jax.experimental import pallas as pl
from jax.experimental.pallas import tpu as pltpu

C_PAD = 128   # conv1 Cout (64) zero-padded to a full lane width


def _round_up(x, m):
    return ((x + m - 1) // m) * m


# --------------------- Kernel 1: conv1 + BN + ReLU --------------------------

def _conv1_kernel(x_ref, w_ref, b_ref, o_ref):
    # x: [tile_rows, K] bf16, w: [K, 128] bf16, b: [1, 128] f32
    y = jnp.dot(x_ref[...], w_ref[...], preferred_element_type=jnp.float32)
    y = jnp.maximum(y + b_ref[...], 0.0)          # folded-BN bias + ReLU (f32)
    o_ref[...] = y.astype(o_ref.dtype)


def conv1_matmul_bias_relu(patches, w, b, *, tile_rows=512):
    n, k = patches.shape
    cout = w.shape[1]
    tile_rows = min(tile_rows, _round_up(n, 16))
    grid = (pl.cdiv(n, tile_rows),)               # partial tail block is masked
    cost = pl.CostEstimate(
        flops=2 * n * k * cout,
        transcendentals=0,
        bytes_accessed=(n * k + k * cout + n * cout) * 2 + cout * 4)
    return pl.pallas_call(
        _conv1_kernel,
        out_shape=jax.ShapeDtypeStruct((n, cout), jnp.bfloat16),
        grid=grid,
        in_specs=[
            pl.BlockSpec((tile_rows, k), lambda i: (i, 0)),
            pl.BlockSpec((k, cout), lambda i: (0, 0)),
            pl.BlockSpec((1, cout), lambda i: (0, 0)),
        ],
        out_specs=pl.BlockSpec((tile_rows, cout), lambda i: (i, 0)),
        compiler_params=pltpu.CompilerParams(
            dimension_semantics=("parallel",)),
        cost_estimate=cost,
    )(patches, w, b)


# --- Kernel 2: fused MaxPool + Conv2 + BN + ReLU + AvgPool + projection -----

def _stage2_kernel(y_ref, w2_ref, b2_ref, wp_ref, bp_ref, o_ref, *, hh, wh):
    c = y_ref.shape[-1]
    dt = y_ref.dtype                              # bf16
    # Parity planes of the conv1 output (post-ReLU, >= 0):
    #   plane[hp][wp][a, b, :] == conv1_out[2a+hp, 2b+wp, :]
    ee = y_ref[0, 0, 0]
    eo = y_ref[0, 0, 1]
    oe = y_ref[0, 1, 0]
    oo = y_ref[0, 1, 1]

    zrow = jnp.zeros((1, wh, c), dt)
    zcol = jnp.zeros((hh, 1, c), dt)

    def sh(x):      # out[p] = x[p-1]; zero at p == 0 (safe: inputs >= 0)
        return jnp.concatenate([zrow, x[:-1]], axis=0)

    def sw(x):      # out[:, q] = x[:, q-1]; zero at q == 0
        return jnp.concatenate([zcol, x[:, :-1]], axis=1)

    # MaxPool2d(kernel=3, stride=2, padding=1): window rows {2p-1,2p,2p+1},
    # cols {2q-1,2q,2q+1}  ->  9 unit-stride shifted maxes over parity planes.
    # All operands are bf16; max is exact, so this matches the f32 result.
    pooled = ee
    for t in (eo, oe, oo, sw(eo), sw(oo), sh(oe), sh(oo), sh(sw(oo))):
        pooled = jnp.maximum(pooled, t)           # [hh, wh, c] bf16

    # Zero-pad by 1 on each spatial side for the 3x3 conv (Conv2d zero pad).
    pzc = jnp.zeros((hh + 2, 1, c), dt)
    pp = jnp.concatenate([zrow, pooled, zrow], axis=0)      # [hh+2, wh,   c]
    pp = jnp.concatenate([pzc, pp, pzc], axis=1)            # [hh+2, wh+2, c]

    # Conv2 as 9 shifted matmuls accumulated in f32 (MXU, bf16 operands).
    cout = w2_ref.shape[-1]
    acc = jnp.zeros((hh * wh, cout), jnp.float32)
    for t in range(9):
        di, dj = t // 3, t % 3
        sl = pp[di:di + hh, dj:dj + wh, :].reshape(hh * wh, c)
        acc = acc + jnp.dot(sl, w2_ref[t],
                            preferred_element_type=jnp.float32)

    acc = jnp.maximum(acc + b2_ref[...], 0.0)               # BN bias + ReLU
    # AdaptiveAvgPool2d((1,1)) + Flatten == spatial mean.
    feat = jnp.sum(acc, axis=0, keepdims=True) * (1.0 / (hh * wh))  # [1, 128]
    # feature_projection: Linear(128, E)  (tiny, kept f32).
    out = jnp.dot(feat, wp_ref[...], preferred_element_type=jnp.float32)
    o_ref[0] = out + bp_ref[...]


def maxpool_conv2_pool_project(y_planes, w2_taps, b2, wp, bp):
    bsz, _, _, hh, wh, c = y_planes.shape
    cout = w2_taps.shape[-1]
    e = wp.shape[-1]
    kern = functools.partial(_stage2_kernel, hh=hh, wh=wh)
    cost = pl.CostEstimate(
        flops=2 * bsz * (9 * hh * wh * c * cout + cout * e),
        transcendentals=0,
        bytes_accessed=(y_planes.size + w2_taps.size) * 2 + bsz * e * 4)
    out = pl.pallas_call(
        kern,
        out_shape=jax.ShapeDtypeStruct((bsz, 1, e), jnp.float32),
        grid=(bsz,),
        in_specs=[
            pl.BlockSpec((1, 2, 2, hh, wh, c),
                         lambda b: (b, 0, 0, 0, 0, 0)),
            pl.BlockSpec((9, c, cout), lambda b: (0, 0, 0)),
            pl.BlockSpec((1, cout), lambda b: (0, 0)),
            pl.BlockSpec((cout, e), lambda b: (0, 0)),
            pl.BlockSpec((1, e), lambda b: (0, 0)),
        ],
        out_specs=pl.BlockSpec((1, 1, e), lambda b: (b, 0, 0)),
        compiler_params=pltpu.CompilerParams(
            dimension_semantics=("parallel",)),
        cost_estimate=cost,
    )(y_planes, w2_taps, b2, wp, bp)
    return out[:, 0, :]


# ------------------------------ JAX glue ------------------------------------

def _im2col_conv1_parity(x_nhwc, ksize=7, stride=2, pad=3):
    """[B,H,W,C] -> patches [B*4*(Ho/2)*(Wo/2), k*k*C] with rows ordered
    (batch, h-parity, w-parity, h/2, w/2) and (kh, kw, Cin)-minor columns."""
    b, h, w, c = x_nhwc.shape
    xp = jnp.pad(x_nhwc, ((0, 0), (pad, pad), (pad, pad), (0, 0)))
    ho = (h + 2 * pad - ksize) // stride + 1
    wo = (w + 2 * pad - ksize) // stride + 1
    assert ho % 2 == 0 and wo % 2 == 0, (ho, wo)
    cols = []
    for ki in range(ksize):
        for kj in range(ksize):
            cols.append(xp[:, ki:ki + stride * ho:stride,
                           kj:kj + stride * wo:stride, :])
    patches = jnp.stack(cols, axis=3)                         # [B,Ho,Wo,k*k,C]
    patches = patches.reshape(b, ho, wo, ksize * ksize * c)
    hh, wh = ho // 2, wo // 2
    patches = patches.reshape(b, hh, 2, wh, 2, ksize * ksize * c)
    patches = jnp.transpose(patches, (0, 2, 4, 1, 3, 5))      # [B,2,2,Hh,Wh,K]
    return patches.reshape(b * 4 * hh * wh, ksize * ksize * c), hh, wh


def _fold_conv1(w_conv, gamma, beta, mean, var, cout_pad, eps=1e-5):
    """Fold eval-mode BN into conv1; pad Cout 64->128 (lane-dense, exact)."""
    cout = w_conv.shape[0]
    scale = gamma / jnp.sqrt(var + eps)
    w = jnp.transpose(w_conv, (2, 3, 1, 0)).reshape(-1, cout) * scale[None, :]
    b = beta - scale * mean
    w = jnp.pad(w, ((0, 0), (0, cout_pad - cout)))
    b = jnp.pad(b, ((0, cout_pad - cout),))
    return w.astype(jnp.bfloat16), b.reshape(1, cout_pad).astype(jnp.float32)


def _fold_conv2_taps(w_conv, b_conv, gamma, beta, mean, var, cin_pad, eps=1e-5):
    """Fold BN into conv2; emit 9 per-tap [Cin_pad,Cout] matrices (zero rows
    for the padded input channels -> exact)."""
    cout, cin, kh, kw = w_conv.shape
    scale = gamma / jnp.sqrt(var + eps)
    w = jnp.transpose(w_conv, (2, 3, 1, 0)) * scale           # [kh,kw,cin,cout]
    b = scale * (b_conv - mean) + beta
    w = jnp.pad(w, ((0, 0), (0, 0), (0, cin_pad - cin), (0, 0)))
    return (w.reshape(kh * kw, cin_pad, cout).astype(jnp.bfloat16),
            b.reshape(1, cout).astype(jnp.float32))


def init_params(key, embedding_dim):
    ks = jax.random.split(key, 12)
    raw = dict(
        w1=jax.random.normal(ks[0], (64, 3, 7, 7), jnp.float32) * 0.05,
        g1=1.0 + 0.1 * jax.random.normal(ks[1], (64,), jnp.float32),
        be1=0.1 * jax.random.normal(ks[2], (64,), jnp.float32),
        m1=0.1 * jax.random.normal(ks[3], (64,), jnp.float32),
        v1=0.5 + jnp.abs(jax.random.normal(ks[4], (64,), jnp.float32)),
        w2=jax.random.normal(ks[5], (128, 64, 3, 3), jnp.float32) * 0.05,
        b2c=0.1 * jax.random.normal(ks[6], (128,), jnp.float32),
        g2=1.0 + 0.1 * jax.random.normal(ks[7], (128,), jnp.float32),
        be2=0.1 * jax.random.normal(ks[8], (128,), jnp.float32),
        m2=0.1 * jax.random.normal(ks[9], (128,), jnp.float32),
        v2=0.5 + jnp.abs(jax.random.normal(ks[10], (128,), jnp.float32)),
        w_lin=jax.random.normal(ks[11], (embedding_dim, 128),
                                jnp.float32) * 0.05,
        b_lin=jnp.zeros((embedding_dim,), jnp.float32),
    )
    w1f, b1f = _fold_conv1(raw["w1"], raw["g1"], raw["be1"], raw["m1"],
                           raw["v1"], C_PAD)
    w2t, b2f = _fold_conv2_taps(raw["w2"], raw["b2c"], raw["g2"], raw["be2"],
                                raw["m2"], raw["v2"], C_PAD)
    params = dict(
        w1=w1f, b1=b1f, w2=w2t, b2=b2f,
        wp=jnp.transpose(raw["w_lin"]).astype(jnp.float32),   # [128, E]
        bp=raw["b_lin"].reshape(1, -1).astype(jnp.float32),   # [1, E]
    )
    return params, raw


def vision_encoder_forward(x_nchw, params):
    """Equivalent of VisionEncoder.forward for the fallback backbone
    (use_spatial_features=False, BN in eval mode)."""
    b = x_nchw.shape[0]
    x = jnp.transpose(x_nchw, (0, 2, 3, 1)).astype(jnp.float32)   # NHWC
    patches, hh, wh = _im2col_conv1_parity(x, ksize=7, stride=2, pad=3)
    patches = patches.astype(jnp.bfloat16)

    # Conv(3->64pad128, 7x7, s2, p3) + BN + ReLU  (Pallas, MXU)
    y = conv1_matmul_bias_relu(patches, params["w1"], params["b1"])
    y = y.reshape(b, 2, 2, hh, wh, C_PAD)                     # parity planes

    # MaxPool + Conv2 + BN + ReLU + AvgPool + Linear  (single Pallas kernel)
    return maxpool_conv2_pool_project(y, params["w2"], params["b2"],
                                      params["wp"], params["bp"])


# ------------------------- pure-JAX reference --------------------------------

def _reference_forward(x_nchw, raw):
    hp = jax.lax.Precision.HIGHEST
    x = jnp.transpose(x_nchw, (0, 2, 3, 1)).astype(jnp.float32)

    def conv(z, w_oihw, stride, pad):
        return jax.lax.conv_general_dilated(
            z, jnp.transpose(w_oihw, (2, 3, 1, 0)),
            window_strides=(stride, stride),
            padding=((pad, pad), (pad, pad)),
            dimension_numbers=("NHWC", "HWIO", "NHWC"), precision=hp)

    def bn(z, g, b, m, v):
        return (z - m) / jnp.sqrt(v + 1e-5) * g + b

    y = jax.nn.relu(bn(conv(x, raw["w1"], 2, 3),
                       raw["g1"], raw["be1"], raw["m1"], raw["v1"]))
    y = jax.lax.reduce_window(y, -jnp.inf, jax.lax.max,
                              (1, 3, 3, 1), (1, 2, 2, 1),
                              ((0, 0), (1, 1), (1, 1), (0, 0)))
    y = conv(y, raw["w2"], 1, 1) + raw["b2c"][None, None, None, :]
    y = jax.nn.relu(bn(y, raw["g2"], raw["be2"], raw["m2"], raw["v2"]))
    feat = jnp.mean(y, axis=(1, 2))
    return jnp.dot(feat, jnp.transpose(raw["w_lin"]),
                   precision=hp) + raw["b_lin"]


if __name__ == "__main__":
    key = jax.random.PRNGKey(0)
    k_x, k_p = jax.random.split(key)

    batch, channels, image_size, embedding_dim = 2, 3, 32, 32
    x = jax.random.normal(k_x, (batch, channels, image_size, image_size),
                          jnp.float32)
    params, raw = init_params(k_p, embedding_dim)

    out = jax.jit(vision_encoder_forward)(x, params)
    out = jax.block_until_ready(out)
    assert out.shape == (batch, embedding_dim), out.shape
    assert bool(jnp.all(jnp.isfinite(out)))

    ref = _reference_forward(x, raw)
    assert jnp.allclose(out, ref, atol=5e-2, rtol=5e-2), (
        float(jnp.max(jnp.abs(out - ref))))
    print("KERNEL_OK")
</pallas_src>

<mosaic_0001>
module attributes {stable_mosaic.version = 11 : i64} {
  func.func @_conv1_kernel(%arg0: i32, %arg1: memref<512x147xbf16, #tpu.memory_space<vmem>>, %arg2: memref<147x128xbf16, #tpu.memory_space<vmem>>, %arg3: memref<1x128xf32, #tpu.memory_space<vmem>>, %arg4: memref<512x128xbf16, #tpu.memory_space<vmem>>) attributes {dimension_semantics = [#tpu.dimension_semantics<parallel>], iteration_bounds = array<i64: 1>, scalar_prefetch = 0 : i64, scratch_operands = 0 : i64, tpu.core_type = #tpu.core_type<tc>, window_params = [{transform_indices = @transform_0, window_bounds = array<i64: 512, 147>}, {pipeline_mode = #tpu.pipeline_mode<synchronous>, transform_indices = @transform_1, window_bounds = array<i64: 147, 128>}, {pipeline_mode = #tpu.pipeline_mode<synchronous>, transform_indices = @transform_2, window_bounds = array<i64: 1, 128>}, {transform_indices = @transform_3, window_bounds = array<i64: 512, 128>}]} {
    %c0 = arith.constant 0 : index
    %c0_0 = arith.constant 0 : index
    %0 = vector.load %arg1[%c0, %c0_0] : memref<512x147xbf16, #tpu.memory_space<vmem>>, vector<512x147xbf16>
    %c0_1 = arith.constant 0 : index
    %c0_2 = arith.constant 0 : index
    %1 = vector.load %arg2[%c0_1, %c0_2] : memref<147x128xbf16, #tpu.memory_space<vmem>>, vector<147x128xbf16>
    %cst = arith.constant dense<0.000000e+00> : vector<512x128xf32>
    %2 = tpu.matmul %0, %1, %cst {dimension_numbers = #tpu.dot_dimension_numbers<[1], [0], [0], [1], [0, 0, 1, 1], [], []>} : vector<512x147xbf16>, vector<147x128xbf16>, vector<512x128xf32> -> vector<512x128xf32>
    %c0_3 = arith.constant 0 : index
    %c0_4 = arith.constant 0 : index
    %3 = vector.load %arg3[%c0_3, %c0_4] : memref<1x128xf32, #tpu.memory_space<vmem>>, vector<1x128xf32>
    %4 = vector.broadcast %3 : vector<1x128xf32> to vector<512x128xf32>
    %5 = arith.addf %2, %4 : vector<512x128xf32>
    %cst_5 = arith.constant 0.000000e+00 : f32
    %6 = vector.broadcast %cst_5 : f32 to vector<512x128xf32>
    %7 = arith.maximumf %5, %6 : vector<512x128xf32>
    %8 = arith.truncf %7 : vector<512x128xf32> to vector<512x128xbf16>
    %c0_6 = arith.constant 0 : index
    %c0_7 = arith.constant 0 : index
    %9 = vector.load %arg4[%c0_6, %c0_7] : memref<512x128xbf16, #tpu.memory_space<vmem>>, vector<512x128xbf16>
    tpu.vector_store %arg4[%c0_6, %c0_7], %8 {strides = array<i32>} : memref<512x128xbf16, #tpu.memory_space<vmem>>, vector<512x128xbf16>,
    return
  }
  func.func @transform_0(%arg0: i32) -> (i32, i32) {
    %c0_i32 = arith.constant 0 : i32
    %c0_i32_0 = arith.constant 0 : i32
    return %arg0, %c0_i32 : i32, i32
  }
  func.func @transform_1(%arg0: i32) -> (i32, i32) {
    %c0_i32 = arith.constant 0 : i32
    %c0_i32_0 = arith.constant 0 : i32
    %c0_i32_1 = arith.constant 0 : i32
    return %c0_i32, %c0_i32_0 : i32, i32
  }
  func.func @transform_2(%arg0: i32) -> (i32, i32) {
    %c0_i32 = arith.constant 0 : i32
    %c0_i32_0 = arith.constant 0 : i32
    %c0_i32_1 = arith.constant 0 : i32
    return %c0_i32, %c0_i32_0 : i32, i32
  }
  func.func @transform_3(%arg0: i32) -> (i32, i32) {
    %c0_i32 = arith.constant 0 : i32
    %c0_i32_0 = arith.constant 0 : i32
    return %arg0, %c0_i32 : i32, i32
  }
}

module attributes {stable_mosaic.version = 11 : i64} {
  func.func @_stage2_kernel(%arg0: i32, %arg1: memref<1x2x2x8x8x128xbf16, #tpu.memory_space<vmem>>, %arg2: memref<9x128x128xbf16, #tpu.memory_space<vmem>>, %arg3: memref<1x128xf32, #tpu.memory_space<vmem>>, %arg4: memref<128x32xf32, #tpu.memory_space<vmem>>, %arg5: memref<1x32xf32, #tpu.memory_space<vmem>>, %arg6: memref<1x1x32xf32, #tpu.memory_space<vmem>>) attributes {dimension_semantics = [#tpu.dimension_semantics<parallel>], iteration_bounds = array<i64: 2>, scalar_prefetch = 0 : i64, scratch_operands = 0 : i64, tpu.core_type = #tpu.core_type<tc>, window_params = [{transform_indices = @transform_0, window_bounds = array<i64: 1, 2, 2, 8, 8, 128>}, {pipeline_mode = #tpu.pipeline_mode<synchronous>, transform_indices = @transform_1, window_bounds = array<i64: 9, 128, 128>}, {pipeline_mode = #tpu.pipeline_mode<synchronous>, transform_indices = @transform_2, window_bounds = array<i64: 1, 128>}, {pipeline_mode = #tpu.pipeline_mode<synchronous>, transform_indices = @transform_3, window_bounds = array<i64: 128, 32>}, {pipeline_mode = #tpu.pipeline_mode<synchronous>, transform_indices = @transform_4, window_bounds = array<i64: 1, 32>}, {transform_indices = @transform_5, window_bounds = array<i64: 1, 1, 32>}]} {
    %c0 = arith.constant 0 : index
    %c0_0 = arith.constant 0 : index
    %c0_1 = arith.constant 0 : index
    %c0_2 = arith.constant 0 : index
    %c0_3 = arith.constant 0 : index
    %c0_4 = arith.constant 0 : index
    %0 = vector.load %arg1[%c0, %c0_0, %c0_1, %c0_2, %c0_3, %c0_4] : memref<1x2x2x8x8x128xbf16, #tpu.memory_space<vmem>>, vector<1x1x1x8x8x128xbf16>
    %1 = vector.shape_cast %0 : vector<1x1x1x8x8x128xbf16> to vector<8x8x128xbf16>
    %c0_5 = arith.constant 0 : index
    %c0_6 = arith.constant 0 : index
    %c1 = arith.constant 1 : index
    %c0_7 = arith.constant 0 : index
    %c0_8 = arith.constant 0 : index
    %c0_9 = arith.constant 0 : index
    %2 = vector.load %arg1[%c0_5, %c0_6, %c1, %c0_7, %c0_8, %c0_9] : memref<1x2x2x8x8x128xbf16, #tpu.memory_space<vmem>>, vector<1x1x1x8x8x128xbf16>
    %3 = vector.shape_cast %2 : vector<1x1x1x8x8x128xbf16> to vector<8x8x128xbf16>
    %c0_10 = arith.constant 0 : index
    %c1_11 = arith.constant 1 : index
    %c0_12 = arith.constant 0 : index
    %c0_13 = arith.constant 0 : index
    %c0_14 = arith.constant 0 : index
    %c0_15 = arith.constant 0 : index
    %4 = vector.load %arg1[%c0_10, %c1_11, %c0_12, %c0_13, %c0_14, %c0_15] : memref<1x2x2x8x8x128xbf16, #tpu.memory_space<vmem>>, vector<1x1x1x8x8x128xbf16>
    %5 = vector.shape_cast %4 : vector<1x1x1x8x8x128xbf16> to vector<8x8x128xbf16>
    %c0_16 = arith.constant 0 : index
    %c1_17 = arith.constant 1 : index
    %c1_18 = arith.constant 1 : index
    %c0_19 = arith.constant 0 : index
    %c0_20 = arith.constant 0 : index
    %c0_21 = arith.constant 0 : index
    %6 = vector.load %arg1[%c0_16, %c1_17, %c1_18, %c0_19, %c0_20, %c0_21] : memref<1x2x2x8x8x128xbf16, #tpu.memory_space<vmem>>, vector<1x1x1x8x8x128xbf16>
    %7 = vector.shape_cast %6 : vector<1x1x1x8x8x128xbf16> to vector<8x8x128xbf16>
    %cst = arith.constant 0.000000e+00 : bf16
    %8 = vector.broadcast %cst : bf16 to vector<1x8x128xbf16>
    %cst_22 = arith.constant 0.000000e+00 : bf16
    %9 = vector.broadcast %cst_22 : bf16 to vector<8x1x128xbf16>
    %10 = vector.extract_strided_slice %3 {offsets = [0, 0, 0], sizes = [8, 7, 128], strides = [1, 1, 1]} : vector<8x8x128xbf16> to vector<8x7x128xbf16>
    %11 = tpu.concatenate %9, %10 in 1 : vector<8x1x128xbf16>, vector<8x7x128xbf16> -> vector<8x8x128xbf16>
    %12 = vector.extract_strided_slice %7 {offsets = [0, 0, 0], sizes = [8, 7, 128], strides = [1, 1, 1]} : vector<8x8x128xbf16> to vector<8x7x128xbf16>
    %13 = tpu.concatenate %9, %12 in 1 : vector<8x1x128xbf16>, vector<8x7x128xbf16> -> vector<8x8x128xbf16>
    %14 = vector.extract_strided_slice %5 {offsets = [0, 0, 0], sizes = [7, 8, 128], strides = [1, 1, 1]} : vector<8x8x128xbf16> to vector<7x8x128xbf16>
    %15 = tpu.concatenate %8, %14 in 0 : vector<1x8x128xbf16>, vector<7x8x128xbf16> -> vector<8x8x128xbf16>
    %16 = vector.extract_strided_slice %7 {offsets = [0, 0, 0], sizes = [7, 8, 128], strides = [1, 1, 1]} : vector<8x8x128xbf16> to vector<7x8x128xbf16>
    %17 = tpu.concatenate %8, %16 in 0 : vector<1x8x128xbf16>, vector<7x8x128xbf16> -> vector<8x8x128xbf16>
    %18 = vector.extract_strided_slice %7 {offsets = [0, 0, 0], sizes = [8, 7, 128], strides = [1, 1, 1]} : vector<8x8x128xbf16> to vector<8x7x128xbf16>
    %19 = tpu.concatenate %9, %18 in 1 : vector<8x1x128xbf16>, vector<8x7x128xbf16> -> vector<8x8x128xbf16>
    %20 = vector.extract_strided_slice %19 {offsets = [0, 0, 0], sizes = [7, 8, 128], strides = [1, 1, 1]} : vector<8x8x128xbf16> to vector<7x8x128xbf16>
    %21 = tpu.concatenate %8, %20 in 0 : vector<1x8x128xbf16>, vector<7x8x128xbf16> -> vector<8x8x128xbf16>
    %22 = arith.maximumf %1, %3 : vector<8x8x128xbf16>
    %23 = arith.maximumf %22, %5 : vector<8x8x128xbf16>
    %24 = arith.maximumf %23, %7 : vector<8x8x128xbf16>
    %25 = arith.maximumf %24, %11 : vector<8x8x128xbf16>
    %26 = arith.maximumf %25, %13 : vector<8x8x128xbf16>
    %27 = arith.maximumf %26, %15 : vector<8x8x128xbf16>
    %28 = arith.maximumf %27, %17 : vector<8x8x128xbf16>
    %29 = arith.maximumf %28, %21 : vector<8x8x128xbf16>
    %cst_23 = arith.constant 0.000000e+00 : bf16
    %30 = vector.broadcast %cst_23 : bf16 to vector<10x1x128xbf16>
    %31 = tpu.concatenate %8, %29, %8 in 0 : vector<1x8x128xbf16>, vector<8x8x128xbf16>, vector<1x8x128xbf16> -> vector<10x8x128xbf16>
    %32 = tpu.concatenate %30, %31, %30 in 1 : vector<10x1x128xbf16>, vector<10x8x128xbf16>, vector<10x1x128xbf16> -> vector<10x10x128xbf16>
    %cst_24 = arith.constant 0.000000e+00 : f32
    %33 = vector.broadcast %cst_24 : f32 to vector<64x128xf32>
    %34 = vector.extract_strided_slice %32 {offsets = [0, 0, 0], sizes = [8, 8, 128], strides = [1, 1, 1]} : vector<10x10x128xbf16> to vector<8x8x128xbf16>
    %35 = vector.shape_cast %34 : vector<8x8x128xbf16> to vector<64x128xbf16>
    %c0_25 = arith.constant 0 : index
    %c0_26 = arith.constant 0 : index
    %c0_27 = arith.constant 0 : index
    %36 = vector.load %arg2[%c0_25, %c0_26, %c0_27] : memref<9x128x128xbf16, #tpu.memory_space<vmem>>, vector<1x128x128xbf16>
    %37 = vector.shape_cast %36 : vector<1x128x128xbf16> to vector<128x128xbf16>
    %cst_28 = arith.constant dense<0.000000e+00> : vector<64x128xf32>
    %38 = tpu.matmul %35, %37, %cst_28 {dimension_numbers = #tpu.dot_dimension_numbers<[1], [0], [0], [1], [0, 0, 1, 1], [], []>} : vector<64x128xbf16>, vector<128x128xbf16>, vector<64x128xf32> -> vector<64x128xf32>
    %39 = arith.addf %33, %38 : vector<64x128xf32>
    %40 = vector.extract_strided_slice %32 {offsets = [0, 1, 0], sizes = [8, 8, 128], strides = [1, 1, 1]} : vector<10x10x128xbf16> to vector<8x8x128xbf16>
    %41 = vector.shape_cast %40 : vector<8x8x128xbf16> to vector<64x128xbf16>
    %c1_29 = arith.constant 1 : index
    %c0_30 = arith.constant 0 : index
    %c0_31 = arith.constant 0 : index
    %42 = vector.load %arg2[%c1_29, %c0_30, %c0_31] : memref<9x128x128xbf16, #tpu.memory_space<vmem>>, vector<1x128x128xbf16>
    %43 = vector.shape_cast %42 : vector<1x128x128xbf16> to vector<128x128xbf16>
    %cst_32 = arith.constant dense<0.000000e+00> : vector<64x128xf32>
    %44 = tpu.matmul %41, %43, %cst_32 {dimension_numbers = #tpu.dot_dimension_numbers<[1], [0], [0], [1], [0, 0, 1, 1], [], []>} : vector<64x128xbf16>, vector<128x128xbf16>, vector<64x128xf32> -> vector<64x128xf32>
    %45 = arith.addf %39, %44 : vector<64x128xf32>
    %46 = vector.extract_strided_slice %32 {offsets = [0, 2, 0], sizes = [8, 8, 128], strides = [1, 1, 1]} : vector<10x10x128xbf16> to vector<8x8x128xbf16>
    %47 = vector.shape_cast %46 : vector<8x8x128xbf16> to vector<64x128xbf16>
    %c2 = arith.constant 2 : index
    %c0_33 = arith.constant 0 : index
    %c0_34 = arith.constant 0 : index
    %48 = vector.load %arg2[%c2, %c0_33, %c0_34] : memref<9x128x128xbf16, #tpu.memory_space<vmem>>, vector<1x128x128xbf16>
    %49 = vector.shape_cast %48 : vector<1x128x128xbf16> to vector<128x128xbf16>
    %cst_35 = arith.constant dense<0.000000e+00> : vector<64x128xf32>
    %50 = tpu.matmul %47, %49, %cst_35 {dimension_numbers = #tpu.dot_dimension_numbers<[1], [0], [0], [1], [0, 0, 1, 1], [], []>} : vector<64x128xbf16>, vector<128x128xbf16>, vector<64x128xf32> -> vector<64x128xf32>
    %51 = arith.addf %45, %50 : vector<64x128xf32>
    %52 = vector.extract_strided_slice %32 {offsets = [1, 0, 0], sizes = [8, 8, 128], strides = [1, 1, 1]} : vector<10x10x128xbf16> to vector<8x8x128xbf16>
    %53 = vector.shape_cast %52 : vector<8x8x128xbf16> to vector<64x128xbf16>
    %c3 = arith.constant 3 : index
    %c0_36 = arith.constant 0 : index
    %c0_37 = arith.constant 0 : index
    %54 = vector.load %arg2[%c3, %c0_36, %c0_37] : memref<9x128x128xbf16, #tpu.memory_space<vmem>>, vector<1x128x128xbf16>
    %55 = vector.shape_cast %54 : vector<1x128x128xbf16> to vector<128x128xbf16>
    %cst_38 = arith.constant dense<0.000000e+00> : vector<64x128xf32>
    %56 = tpu.matmul %53, %55, %cst_38 {dimension_numbers = #tpu.dot_dimension_numbers<[1], [0], [0], [1], [0, 0, 1, 1], [], []>} : vector<64x128xbf16>, vector<128x128xbf16>, vector<64x128xf32> -> vector<64x128xf32>
    %57 = arith.addf %51, %56 : vector<64x128xf32>
    %58 = vector.extract_strided_slice %32 {offsets = [1, 1, 0], sizes = [8, 8, 128], strides = [1, 1, 1]} : vector<10x10x128xbf16> to vector<8x8x128xbf16>
    %59 = vector.shape_cast %58 : vector<8x8x128xbf16> to vector<64x128xbf16>
    %c4 = arith.constant 4 : index
    %c0_39 = arith.constant 0 : index
    %c0_40 = arith.constant 0 : index
    %60 = vector.load %arg2[%c4, %c0_39, %c0_40] : memref<9x128x128xbf16, #tpu.memory_space<vmem>>, vector<1x128x128xbf16>
    %61 = vector.shape_cast %60 : vector<1x128x128xbf16> to vector<128x128xbf16>
    %cst_41 = arith.constant dense<0.000000e+00> : vector<64x128xf32>
    %62 = tpu.matmul %59, %61, %cst_41 {dimension_numbers = #tpu.dot_dimension_numbers<[1], [0], [0], [1], [0, 0, 1, 1], [], []>} : vector<64x128xbf16>, vector<128x128xbf16>, vector<64x128xf32> -> vector<64x128xf32>
    %63 = arith.addf %57, %62 : vector<64x128xf32>
    %64 = vector.extract_strided_slice %32 {offsets = [1, 2, 0], sizes = [8, 8, 128], strides = [1, 1, 1]} : vector<10x10x128xbf16> to vector<8x8x128xbf16>
    %65 = vector.shape_cast %64 : vector<8x8x128xbf16> to vector<64x128xbf16>
    %c5 = arith.constant 5 : index
    %c0_42 = arith.constant 0 : index
    %c0_43 = arith.constant 0 : index
    %66 = vector.load %arg2[%c5, %c0_42, %c0_43] : memref<9x128x128xbf16, #tpu.memory_space<vmem>>, vector<1x128x128xbf16>
    %67 = vector.shape_cast %66 : vector<1x128x128xbf16> to vector<128x128xbf16>
    %cst_44 = arith.constant dense<0.000000e+00> : vector<64x128xf32>
    %68 = tpu.matmul %65, %67, %cst_44 {dimension_numbers = #tpu.dot_dimension_numbers<[1], [0], [0], [1], [0, 0, 1, 1], [], []>} : vector<64x128xbf16>, vector<128x128xbf16>, vector<64x128xf32> -> vector<64x128xf32>
    %69 = arith.addf %63, %68 : vector<64x128xf32>
    %70 = vector.extract_strided_slice %32 {offsets = [2, 0, 0], sizes = [8, 8, 128], strides = [1, 1, 1]} : vector<10x10x128xbf16> to vector<8x8x128xbf16>
    %71 = vector.shape_cast %70 : vector<8x8x128xbf16> to vector<64x128xbf16>
    %c6 = arith.constant 6 : index
    %c0_45 = arith.constant 0 : index
    %c0_46 = arith.constant 0 : index
    %72 = vector.load %arg2[%c6, %c0_45, %c0_46] : memref<9x128x128xbf16, #tpu.memory_space<vmem>>, vector<1x128x128xbf16>
    %73 = vector.shape_cast %72 : vector<1x128x128xbf16> to vector<128x128xbf16>
    %cst_47 = arith.constant dense<0.000000e+00> : vector<64x128xf32>
    %74 = tpu.matmul %71, %73, %cst_47 {dimension_numbers = #tpu.dot_dimension_numbers<[1], [0], [0], [1], [0, 0, 1, 1], [], []>} : vector<64x128xbf16>, vector<128x128xbf16>, vector<64x128xf32> -> vector<64x128xf32>
    %75 = arith.addf %69, %74 : vector<64x128xf32>
    %76 = vector.extract_strided_slice %32 {offsets = [2, 1, 0], sizes = [8, 8, 128], strides = [1, 1, 1]} : vector<10x10x128xbf16> to vector<8x8x128xbf16>
    %77 = vector.shape_cast %76 : vector<8x8x128xbf16> to vector<64x128xbf16>
    %c7 = arith.constant 7 : index
    %c0_48 = arith.constant 0 : index
    %c0_49 = arith.constant 0 : index
    %78 = vector.load %arg2[%c7, %c0_48, %c0_49] : memref<9x128x128xbf16, #tpu.memory_space<vmem>>, vector<1x128x128xbf16>
    %79 = vector.shape_cast %78 : vector<1x128x128xbf16> to vector<128x128xbf16>
    %cst_50 = arith.constant dense<0.000000e+00> : vector<64x128xf32>
    %80 = tpu.matmul %77, %79, %cst_50 {dimension_numbers = #tpu.dot_dimension_numbers<[1], [0], [0], [1], [0, 0, 1, 1], [], []>} : vector<64x128xbf16>, vector<128x128xbf16>, vector<64x128xf32> -> vector<64x128xf32>
    %81 = arith.addf %75, %80 : vector<64x128xf32>
    %82 = vector.extract_strided_slice %32 {offsets = [2, 2, 0], sizes = [8, 8, 128], strides = [1, 1, 1]} : vector<10x10x128xbf16> to vector<8x8x128xbf16>
    %83 = vector.shape_cast %82 : vector<8x8x128xbf16> to vector<64x128xbf16>
    %c8 = arith.constant 8 : index
    %c0_51 = arith.constant 0 : index
    %c0_52 = arith.constant 0 : index
    %84 = vector.load %arg2[%c8, %c0_51, %c0_52] : memref<9x128x128xbf16, #tpu.memory_space<vmem>>, vector<1x128x128xbf16>
    %85 = vector.shape_cast %84 : vector<1x128x128xbf16> to vector<128x128xbf16>
    %cst_53 = arith.constant dense<0.000000e+00> : vector<64x128xf32>
    %86 = tpu.matmul %83, %85, %cst_53 {dimension_numbers = #tpu.dot_dimension_numbers<[1], [0], [0], [1], [0, 0, 1, 1], [], []>} : vector<64x128xbf16>, vector<128x128xbf16>, vector<64x128xf32> -> vector<64x128xf32>
    %87 = arith.addf %81, %86 : vector<64x128xf32>
    %c0_54 = arith.constant 0 : index
    %c0_55 = arith.constant 0 : index
    %88 = vector.load %arg3[%c0_54, %c0_55] : memref<1x128xf32, #tpu.memory_space<vmem>>, vector<1x128xf32>
    %89 = vector.broadcast %88 : vector<1x128xf32> to vector<64x128xf32>
    %90 = arith.addf %87, %89 : vector<64x128xf32>
    %cst_56 = arith.constant 0.000000e+00 : f32
    %91 = vector.broadcast %cst_56 : f32 to vector<64x128xf32>
    %92 = arith.maximumf %90, %91 : vector<64x128xf32>
    %cst_57 = arith.constant dense<0.000000e+00> : vector<128xf32>
    %93 = vector.multi_reduction <add>, %92, %cst_57 [0] : vector<64x128xf32> to vector<128xf32>
    %94 = vector.shape_cast %93 : vector<128xf32> to vector<1x128xf32>
    %cst_58 = arith.constant 1.562500e-02 : f32
    %95 = vector.broadcast %cst_58 : f32 to vector<1x128xf32>
    %96 = arith.mulf %94, %95 : vector<1x128xf32>
    %c0_59 = arith.constant 0 : index
    %c0_60 = arith.constant 0 : index
    %97 = vector.load %arg4[%c0_59, %c0_60] : memref<128x32xf32, #tpu.memory_space<vmem>>, vector<128x32xf32>
    %cst_61 = arith.constant dense<0.000000e+00> : vector<1x32xf32>
    %98 = tpu.matmul %96, %97, %cst_61 {dimension_numbers = #tpu.dot_dimension_numbers<[1], [0], [0], [1], [0, 0, 1, 1], [], []>} : vector<1x128xf32>, vector<128x32xf32>, vector<1x32xf32> -> vector<1x32xf32>
    %c0_62 = arith.constant 0 : index
    %c0_63 = arith.constant 0 : index
    %99 = vector.load %arg5[%c0_62, %c0_63] : memref<1x32xf32, #tpu.memory_space<vmem>>, vector<1x32xf32>
    %100 = arith.addf %98, %99 : vector<1x32xf32>
    %c0_64 = arith.constant 0 : index
    %c0_65 = arith.constant 0 : index
    %c0_66 = arith.constant 0 : index
    %101 = vector.load %arg6[%c0_64, %c0_65, %c0_66] : memref<1x1x32xf32, #tpu.memory_space<vmem>>, vector<1x1x32xf32>
    %102 = vector.shape_cast %101 : vector<1x1x32xf32> to vector<1x32xf32>
    %103 = vector.shape_cast %100 : vector<1x32xf32> to vector<1x1x32xf32>
    tpu.vector_store %arg6[%c0_64, %c0_65, %c0_66], %103 {strides = array<i32>} : memref<1x1x32xf32, #tpu.memory_space<vmem>>, vector<1x1x32xf32>,
    return
  }
  func.func @transform_0(%arg0: i32) -> (i32, i32, i32, i32, i32, i32) {
    %c0_i32 = arith.constant 0 : i32
    %c0_i32_0 = arith.constant 0 : i32
    %c0_i32_1 = arith.constant 0 : i32
    %c0_i32_2 = arith.constant 0 : i32
    %c0_i32_3 = arith.constant 0 : i32
    %c0_i32_4 = arith.constant 0 : i32
    return %arg0, %c0_i32, %c0_i32_0, %c0_i32_1, %c0_i32_2, %c0_i32_3 : i32, i32, i32, i32, i32, i32
  }
  func.func @transform_1(%arg0: i32) -> (i32, i32, i32) {
    %c0_i32 = arith.constant 0 : i32
    %c0_i32_0 = arith.constant 0 : i32
    %c0_i32_1 = arith.constant 0 : i32
    %c0_i32_2 = arith.constant 0 : i32
    return %c0_i32, %c0_i32_0, %c0_i32_1 : i32, i32, i32
  }
  func.func @transform_2(%arg0: i32) -> (i32, i32) {
    %c0_i32 = arith.constant 0 : i32
    %c0_i32_0 = arith.constant 0 : i32
    %c0_i32_1 = arith.constant 0 : i32
    return %c0_i32, %c0_i32_0 : i32, i32
  }
  func.func @transform_3(%arg0: i32) -> (i32, i32) {
    %c0_i32 = arith.constant 0 : i32
    %c0_i32_0 = arith.constant 0 : i32
    %c0_i32_1 = arith.constant 0 : i32
    return %c0_i32, %c0_i32_0 : i32, i32
  }
  func.func @transform_4(%arg0: i32) -> (i32, i32) {
    %c0_i32 = arith.constant 0 : i32
    %c0_i32_0 = arith.constant 0 : i32
    %c0_i32_1 = arith.constant 0 : i32
    return %c0_i32, %c0_i32_0 : i32, i32
  }
  func.func @transform_5(%arg0: i32) -> (i32, i32, i32) {
    %c0_i32 = arith.constant 0 : i32
    %c0_i32_0 = arith.constant 0 : i32
    %c0_i32_1 = arith.constant 0 : i32
    return %arg0, %c0_i32, %c0_i32_0 : i32, i32, i32
  }
}

</mosaic_0001>

<llo_original>
// kernel: vision_encoder_forward.2
$region0: #{vision_encoder_forward.2}
  #allocation0 [shape = 'u32[]', space=smem, size = 0x4, offset = 0x4, fixed_abs, tag = 'smem constant byte address 0x4 - core index']
  #allocation1 [shape = 'u32[72,128]{1,0:T(1,128)}', space=vmem, size = 0x9000, scoped, tag = 'internal scratch']
  %s0 = inlined_call_operand.vmem [shape: bf16[512,147], index: 0, kind: input, shape index: {}]
  %s1 = inlined_call_operand.vmem [shape: bf16[147,128], index: 1, kind: input, shape index: {}]
  %s2 = inlined_call_operand.vmem [shape: f32[1,128], index: 2, kind: input, shape index: {}]
  %s3 = inlined_call_operand.vmem [shape: bf16[512,128], index: 3, kind: output, shape index: {}]
  %s4 = sld [smem:[#allocation0]]
  $region22: #{vision_encoder_forward.2} parent=0
    _
  %s6 = ssub.s32 1, %s4
  %s7 = scalar_select 0, %s6, %s4
  // Predicated region
  $region2: #{vision_encoder_forward.2} parent=0 // pred_check
    _
  $region3: #{vision_encoder_forward.2} parent=0 // pred_check_branch
    %9 = sbr.rel (0) target = $region5
  $region4: #{vision_encoder_forward.2} parent=0 // pred_region
    _
  $region5: #{vision_encoder_forward.2} parent=0 // pred_fallthru
    _
  // Predicated region
  $region6: #{vision_encoder_forward.2} parent=0 // pred_check
    _
  $region7: #{vision_encoder_forward.2} parent=0 // pred_check_branch
    %11 = sbr.rel (0) target = $region9
  $region8: #{vision_encoder_forward.2} parent=0 // pred_region
    _
  $region9: #{vision_encoder_forward.2} parent=0 // pred_fallthru
    _
  // Predicated region
  $region10: #{vision_encoder_forward.2} parent=0 // pred_check
    _
  $region11: #{vision_encoder_forward.2} parent=0 // pred_check_branch
    %13 = sbr.rel (0) target = $region13
  $region12: #{vision_encoder_forward.2} parent=0 // pred_region
    _
  $region13: #{vision_encoder_forward.2} parent=0 // pred_fallthru
    _
  %v15 = vld [vmem:[%s0] sm:$0xff]
  %v16 = vld [vmem:[%s0 + $0x8] sm:$0xff]
  %v17 = vld [vmem:[%s0 + $0x10] sm:$0xff]
  %v18 = vld [vmem:[%s0 + $0x18] sm:$0xff]
  %v19 = vld [vmem:[%s0 + $0x20] sm:$0xff]
  %v20 = vld [vmem:[%s0 + $0x28] sm:$0xff]
  %v21 = vld [vmem:[%s0 + $0x30] sm:$0xff]
  %v22 = vld [vmem:[%s0 + $0x38] sm:$0xff]
  %v23 = vld [vmem:[%s0 + $0x40] sm:$0xff]
  %v24 = vld [vmem:[%s0 + $0x48] sm:$0xff]
  %v25 = vld [vmem:[%s0 + $0x50] sm:$0xff]
  %v26 = vld [vmem:[%s0 + $0x58] sm:$0xff]
  %v27 = vld [vmem:[%s0 + $0x60] sm:$0xff]
  %v28 = vld [vmem:[%s0 + $0x68] sm:$0xff]
  %v29 = vld [vmem:[%s0 + $0x70] sm:$0xff]
  %v30 = vld [vmem:[%s0 + $0x78] sm:$0xff]
  %v31 = vld [vmem:[%s0 + $0x80] sm:$0xff]
  %v32 = vld [vmem:[%s0 + $0x88] sm:$0xff]
  %v33 = vld [vmem:[%s0 + $0x90] sm:$0xff]
  %v34 = vld [vmem:[%s0 + $0x98] sm:$0xff]
  %v35 = vld [vmem:[%s0 + $0xa0] sm:$0xff]
  %v36 = vld [vmem:[%s0 + $0xa8] sm:$0xff]
  %v37 = vld [vmem:[%s0 + $0xb0] sm:$0xff]
  %v38 = vld [vmem:[%s0 + $0xb8] sm:$0xff]
  %v39 = vld [vmem:[%s0 + $0xc0] sm:$0xff]
  %v40 = vld [vmem:[%s0 + $0xc8] sm:$0xff]
  %v41 = vld [vmem:[%s0 + $0xd0] sm:$0xff]
  %v42 = vld [vmem:[%s0 + $0xd8] sm:$0xff]
  %v43 = vld [vmem:[%s0 + $0xe0] sm:$0xff]
  %v44 = vld [vmem:[%s0 + $0xe8] sm:$0xff]
  %v45 = vld [vmem:[%s0 + $0xf0] sm:$0xff]
  %v46 = vld [vmem:[%s0 + $0xf8] sm:$0xff]
  %v47 = vld [vmem:[%s0 + $0x100] sm:$0xff]
  %v48 = vld [vmem:[%s0 + $0x108] sm:$0xff]
  %v49 = vld [vmem:[%s0 + $0x110] sm:$0xff]
  %v50 = vld [vmem:[%s0 + $0x118] sm:$0xff]
  %v51 = vld [vmem:[%s0 + $0x120] sm:$0xff]
  %v52 = vld [vmem:[%s0 + $0x128] sm:$0xff]
  %v53 = vld [vmem:[%s0 + $0x130] sm:$0xff]
  %v54 = vld [vmem:[%s0 + $0x138] sm:$0xff]
  %v55 = vld [vmem:[%s0 + $0x140] sm:$0xff]
  %v56 = vld [vmem:[%s0 + $0x148] sm:$0xff]
  %v57 = vld [vmem:[%s0 + $0x150] sm:$0xff]
  %v58 = vld [vmem:[%s0 + $0x158] sm:$0xff]
  %v59 = vld [vmem:[%s0 + $0x160] sm:$0xff]
  %v60 = vld [vmem:[%s0 + $0x168] sm:$0xff]
  %v61 = vld [vmem:[%s0 + $0x170] sm:$0xff]
  %v62 = vld [vmem:[%s0 + $0x178] sm:$0xff]
  %v63 = vld [vmem:[%s0 + $0x180] sm:$0xff]
  %v64 = vld [vmem:[%s0 + $0x188] sm:$0xff]
  %v65 = vld [vmem:[%s0 + $0x190] sm:$0xff]
  %v66 = vld [vmem:[%s0 + $0x198] sm:$0xff]
  %v67 = vld [vmem:[%s0 + $0x1a0] sm:$0xff]
  %v68 = vld [vmem:[%s0 + $0x1a8] sm:$0xff]
  %v69 = vld [vmem:[%s0 + $0x1b0] sm:$0xff]
  %v70 = vld [vmem:[%s0 + $0x1b8] sm:$0xff]
  %v71 = vld [vmem:[%s0 + $0x1c0] sm:$0xff]
  %v72 = vld [vmem:[%s0 + $0x1c8] sm:$0xff]
  %v73 = vld [vmem:[%s0 + $0x1d0] sm:$0xff]
  %v74 = vld [vmem:[%s0 + $0x1d8] sm:$0xff]
  %v75 = vld [vmem:[%s0 + $0x1e0] sm:$0xff]
  %v76 = vld [vmem:[%s0 + $0x1e8] sm:$0xff]
  %v77 = vld [vmem:[%s0 + $0x1f0] sm:$0xff]
  %v78 = vld [vmem:[%s0 + $0x1f8] sm:$0xff]
  %v79 = vld [vmem:[%s1] sm:$0xf]
  %v80 = vld [vmem:[%s1 + $0x4] sm:$0xf]
  %v81 = vld [vmem:[%s1 + $0x8] sm:$0xf]
  %v82 = vld [vmem:[%s1 + $0xc] sm:$0xf]
  %v83 = vld [vmem:[%s1 + $0x10] sm:$0xf]
  %v84 = vld [vmem:[%s1 + $0x14] sm:$0xf]
  %v85 = vld [vmem:[%s1 + $0x18] sm:$0xf]
  %v86 = vld [vmem:[%s1 + $0x1c] sm:$0xf]
  %v87 = vld [vmem:[%s1 + $0x20] sm:$0xf]
  %v88 = vld [vmem:[%s1 + $0x24] sm:$0xf]
  %v89 = vld [vmem:[%s1 + $0x28] sm:$0xf]
  %v90 = vld [vmem:[%s1 + $0x2c] sm:$0xf]
  %v91 = vld [vmem:[%s1 + $0x30] sm:$0xf]
  %v92 = vld [vmem:[%s1 + $0x34] sm:$0xf]
  %v93 = vld [vmem:[%s1 + $0x38] sm:$0xf]
  %v94 = vld [vmem:[%s1 + $0x3c] sm:$0xf]
  %v95 = vld [vmem:[%s1 + $0x40] sm:$0xf]
  %v96 = vld [vmem:[%s1 + $0x44] sm:$0xf]
  %v97 = vld [vmem:[%s1 + $0x48] sm:$0x3]
  %v98 = vld [vmem:[%s2] sm:$0x1]
  %v100 = vperm.slane %v98, 0
  %v166 = vunpack.c.l.b16 %v15
  %v167 = vunpack.c.h.b16 %v15
  %v168 = vunpack.c.l.b16 %v16
  %v169 = vunpack.c.h.b16 %v16
  %v170 = vunpack.c.l.b16 %v17
  %v171 = vunpack.c.h.b16 %v17
  %v172 = vunpack.c.l.b16 %v18
  %v173 = vunpack.c.h.b16 %v18
  %v174 = vunpack.c.l.b16 %v19
  %v175 = vunpack.c.h.b16 %v19
  %v176 = vunpack.c.l.b16 %v20
  %v177 = vunpack.c.h.b16 %v20
  %v178 = vunpack.c.l.b16 %v21
  %v179 = vunpack.c.h.b16 %v21
  %v180 = vunpack.c.l.b16 %v22
  %v181 = vunpack.c.h.b16 %v22
  %v182 = vunpack.c.l.b16 %v23
  %v183 = vunpack.c.h.b16 %v23
  %v184 = vunpack.c.l.b16 %v24
  %v185 = vunpack.c.h.b16 %v24
  %v186 = vunpack.c.l.b16 %v25
  %v187 = vunpack.c.h.b16 %v25
  %v188 = vunpack.c.l.b16 %v26
  %v189 = vunpack.c.h.b16 %v26
  %v190 = vunpack.c.l.b16 %v27
  %v191 = vunpack.c.h.b16 %v27
  %v192 = vunpack.c.l.b16 %v28
  %v193 = vunpack.c.h.b16 %v28
  %v194 = vunpack.c.l.b16 %v29
  %v195 = vunpack.c.h.b16 %v29
  %v196 = vunpack.c.l.b16 %v30
  %v197 = vunpack.c.h.b16 %v30
  %v198 = vunpack.c.l.b16 %v31
  %v199 = vunpack.c.h.b16 %v31
  %v200 = vunpack.c.l.b16 %v32
  %v201 = vunpack.c.h.b16 %v32
  %v202 = vunpack.c.l.b16 %v33
  %v203 = vunpack.c.h.b16 %v33
  %v204 = vunpack.c.l.b16 %v34
  %v205 = vunpack.c.h.b16 %v34
  %v206 = vunpack.c.l.b16 %v35
  %v207 = vunpack.c.h.b16 %v35
  %v208 = vunpack.c.l.b16 %v36
  %v209 = vunpack.c.h.b16 %v36
  %v210 = vunpack.c.l.b16 %v37
  %v211 = vunpack.c.h.b16 %v37
  %v212 = vunpack.c.l.b16 %v38
  %v213 = vunpack.c.h.b16 %v38
  %v214 = vunpack.c.l.b16 %v39
  %v215 = vunpack.c.h.b16 %v39
  %v216 = vunpack.c.l.b16 %v40
  %v217 = vunpack.c.h.b16 %v40
  %v218 = vunpack.c.l.b16 %v41
  %v219 = vunpack.c.h.b16 %v41
  %v220 = vunpack.c.l.b16 %v42
  %v221 = vunpack.c.h.b16 %v42
  %v222 = vunpack.c.l.b16 %v43
  %v223 = vunpack.c.h.b16 %v43
  %v224 = vunpack.c.l.b16 %v44
  %v225 = vunpack.c.h.b16 %v44
  %v226 = vunpack.c.l.b16 %v45
  %v227 = vunpack.c.h.b16 %v45
  %v228 = vunpack.c.l.b16 %v46
  %v229 = vunpack.c.h.b16 %v46
  %v230 = vunpack.c.l.b16 %v47
  %v231 = vunpack.c.h.b16 %v47
  %v232 = vunpack.c.l.b16 %v48
  %v233 = vunpack.c.h.b16 %v48
  %v234 = vunpack.c.l.b16 %v49
  %v235 = vunpack.c.h.b16 %v49
  %v236 = vunpack.c.l.b16 %v50
  %v237 = vunpack.c.h.b16 %v50
  %v238 = vunpack.c.l.b16 %v51
  %v239 = vunpack.c.h.b16 %v51
  %v240 = vunpack.c.l.b16 %v52
  %v241 = vunpack.c.h.b16 %v52
  %v242 = vunpack.c.l.b16 %v53
  %v243 = vunpack.c.h.b16 %v53
  %v244 = vunpack.c.l.b16 %v54
  %v245 = vunpack.c.h.b16 %v54
  %v246 = vunpack.c.l.b16 %v55
  %v247 = vunpack.c.h.b16 %v55
  %v248 = vunpack.c.l.b16 %v56
  %v249 = vunpack.c.h.b16 %v56
  %v250 = vunpack.c.l.b16 %v57
  %v251 = vunpack.c.h.b16 %v57
  %v252 = vunpack.c.l.b16 %v58
  %v253 = vunpack.c.h.b16 %v58
  %v254 = vunpack.c.l.b16 %v59
  %v255 = vunpack.c.h.b16 %v59
  %v256 = vunpack.c.l.b16 %v60
  %v257 = vunpack.c.h.b16 %v60
  %v258 = vunpack.c.l.b16 %v61
  %v259 = vunpack.c.h.b16 %v61
  %v260 = vunpack.c.l.b16 %v62
  %v261 = vunpack.c.h.b16 %v62
  %v262 = vunpack.c.l.b16 %v63
  %v263 = vunpack.c.h.b16 %v63
  %v264 = vunpack.c.l.b16 %v64
  %v265 = vunpack.c.h.b16 %v64
  %v266 = vunpack.c.l.b16 %v65
  %v267 = vunpack.c.h.b16 %v65
  %v268 = vunpack.c.l.b16 %v66
  %v269 = vunpack.c.h.b16 %v66
  %v270 = vunpack.c.l.b16 %v67
  %v271 = vunpack.c.h.b16 %v67
  %v272 = vunpack.c.l.b16 %v68
  %v273 = vunpack.c.h.b16 %v68
  %v274 = vunpack.c.l.b16 %v69
  %v275 = vunpack.c.h.b16 %v69
  %v276 = vunpack.c.l.b16 %v70
  %v277 = vunpack.c.h.b16 %v70
  %v278 = vunpack.c.l.b16 %v71
  %v279 = vunpack.c.h.b16 %v71
  %v280 = vunpack.c.l.b16 %v72
  %v281 = vunpack.c.h.b16 %v72
  %v282 = vunpack.c.l.b16 %v73
  %v283 = vunpack.c.h.b16 %v73
  %v284 = vunpack.c.l.b16 %v74
  %v285 = vunpack.c.h.b16 %v74
  %v286 = vunpack.c.l.b16 %v75
  %v287 = vunpack.c.h.b16 %v75
  %v288 = vunpack.c.l.b16 %v76
  %v289 = vunpack.c.h.b16 %v76
  %v290 = vunpack.c.l.b16 %v77
  %v291 = vunpack.c.h.b16 %v77
  %v292 = vunpack.c.l.b16 %v78
  %v293 = vunpack.c.h.b16 %v78
  %v294 = vpack.c.b16 %v168, %v166
  %v295 = vpack.c.b16 %v169, %v167
  %v296 = vpack.c.b16 %v172, %v170
  %v297 = vpack.c.b16 %v173, %v171
  %v298 = vpack.c.b16 %v176, %v174
  %v299 = vpack.c.b16 %v177, %v175
  %v300 = vpack.c.b16 %v180, %v178
  %v301 = vpack.c.b16 %v181, %v179
  %v302 = vpack.c.b16 %v184, %v182
  %v303 = vpack.c.b16 %v185, %v183
  %v304 = vpack.c.b16 %v188, %v186
  %v305 = vpack.c.b16 %v189, %v187
  %v306 = vpack.c.b16 %v192, %v190
  %v307 = vpack.c.b16 %v193, %v191
  %v308 = vpack.c.b16 %v196, %v194
  %v309 = vpack.c.b16 %v197, %v195
  %v310 = vpack.c.b16 %v200, %v198
  %v311 = vpack.c.b16 %v201, %v199
  %v312 = vpack.c.b16 %v204, %v202
  %v313 = vpack.c.b16 %v205, %v203
  %v314 = vpack.c.b16 %v208, %v206
  %v315 = vpack.c.b16 %v209, %v207
  %v316 = vpack.c.b16 %v212, %v210
  %v317 = vpack.c.b16 %v213, %v211
  %v318 = vpack.c.b16 %v216, %v214
  %v319 = vpack.c.b16 %v217, %v215
  %v320 = vpack.c.b16 %v220, %v218
  %v321 = vpack.c.b16 %v221, %v219
  %v322 = vpack.c.b16 %v224, %v222
  %v323 = vpack.c.b16 %v225, %v223
  %v324 = vpack.c.b16 %v228, %v226
  %v325 = vpack.c.b16 %v229, %v227
  %v326 = vpack.c.b16 %v232, %v230
  %v327 = vpack.c.b16 %v233, %v231
  %v328 = vpack.c.b16 %v236, %v234
  %v329 = vpack.c.b16 %v237, %v235
  %v330 = vpack.c.b16 %v240, %v238
  %v331 = vpack.c.b16 %v241, %v239
  %v332 = vpack.c.b16 %v244, %v242
  %v333 = vpack.c.b16 %v245, %v243
  %v334 = vpack.c.b16 %v248, %v246
  %v335 = vpack.c.b16 %v249, %v247
  %v336 = vpack.c.b16 %v252, %v250
  %v337 = vpack.c.b16 %v253, %v251
  %v338 = vpack.c.b16 %v256, %v254
  %v339 = vpack.c.b16 %v257, %v255
  %v340 = vpack.c.b16 %v260, %v258
  %v341 = vpack.c.b16 %v261, %v259
  %v342 = vpack.c.b16 %v264, %v262
  %v343 = vpack.c.b16 %v265, %v263
  %v344 = vpack.c.b16 %v268, %v266
  %v345 = vpack.c.b16 %v269, %v267
  %v346 = vpack.c.b16 %v272, %v270
  %v347 = vpack.c.b16 %v273, %v271
  %v348 = vpack.c.b16 %v276, %v274
  %v349 = vpack.c.b16 %v277, %v275
  %v350 = vpack.c.b16 %v280, %v278
  %v351 = vpack.c.b16 %v281, %v279
  %v352 = vpack.c.b16 %v284, %v282
  %v353 = vpack.c.b16 %v285, %v283
  %v354 = vpack.c.b16 %v288, %v286
  %v355 = vpack.c.b16 %v289, %v287
  %v356 = vpack.c.b16 %v292, %v290
  %v357 = vpack.c.b16 %v293, %v291
  %v409 = vunpack.c.l.b16 %v79
  %v410 = vunpack.c.l.b16 %v80
  %v411 = vunpack.c.l.b16 %v81
  %v412 = vunpack.c.l.b16 %v82
  %v413 = vunpack.c.l.b16 %v83
  %v414 = vunpack.c.l.b16 %v84
  %v415 = vunpack.c.l.b16 %v85
  %v416 = vunpack.c.l.b16 %v86
  %v417 = vunpack.c.l.b16 %v87
  %v418 = vunpack.c.l.b16 %v88
  %v419 = vunpack.c.l.b16 %v89
  %v420 = vunpack.c.l.b16 %v90
  %v421 = vunpack.c.l.b16 %v91
  %v422 = vunpack.c.l.b16 %v92
  %v423 = vunpack.c.l.b16 %v93
  %v424 = vunpack.c.l.b16 %v94
  %v425 = vunpack.c.l.b16 %v95
  %v426 = vunpack.c.l.b16 %v96
  %v427 = vunpack.c.l.b16 %v97
  %v428 = vpack.c.b16 %v410, %v409
  %v429 = vpack.c.b16 %v412, %v411
  %v430 = vpack.c.b16 %v414, %v413
  %v431 = vpack.c.b16 %v416, %v415
  %v432 = vpack.c.b16 %v418, %v417
  %v433 = vpack.c.b16 %v420, %v419
  %v434 = vpack.c.b16 %v422, %v421
  %v435 = vpack.c.b16 %v424, %v423
  %v436 = vpack.c.b16 %v426, %v425
  %v437 = vpack.c.b16 %v427, %v427
  %vm447 = vcmask 154624
  %v449 = vsel %vm447, %v295, 0
  %v452 = vsel %vm447, %v297, 0
  %v455 = vsel %vm447, %v299, 0
  %v458 = vsel %vm447, %v301, 0
  %v461 = vsel %vm447, %v303, 0
  %v464 = vsel %vm447, %v305, 0
  %v467 = vsel %vm447, %v307, 0
  %v470 = vsel %vm447, %v309, 0
  %v473 = vsel %vm447, %v311, 0
  %v476 = vsel %vm447, %v313, 0
  %v479 = vsel %vm447, %v315, 0
  %v482 = vsel %vm447, %v317, 0
  %v485 = vsel %vm447, %v319, 0
  %v488 = vsel %vm447, %v321, 0
  %v491 = vsel %vm447, %v323, 0
  %v494 = vsel %vm447, %v325, 0
  %v497 = vsel %vm447, %v327, 0
  %v500 = vsel %vm447, %v329, 0
  %v503 = vsel %vm447, %v331, 0
  %v506 = vsel %vm447, %v333, 0
  %v509 = vsel %vm447, %v335, 0
  %v512 = vsel %vm447, %v337, 0
  %v515 = vsel %vm447, %v339, 0
  %v518 = vsel %vm447, %v341, 0
  %v521 = vsel %vm447, %v343, 0
  %v524 = vsel %vm447, %v345, 0
  %v527 = vsel %vm447, %v347, 0
  %v530 = vsel %vm447, %v349, 0
  %v533 = vsel %vm447, %v351, 0
  %v536 = vsel %vm447, %v353, 0
  %v539 = vsel %vm447, %v355, 0
  %v542 = vsel %vm447, %v357, 0
  %vm544 = vcmask 1040384
  %vm545 = vcmask 1041408
  %v546 = vsel %vm544, 4294967295, 65535
  %v547 = vsel %vm545, %v546, 0
  %v549 = vand.u32 %v437, %v547
  %551 = vmatpush.bf16.msra.mxu0 %v435
  %552 = vmatpush.bf16.msra.mxu0 %v434
  %553 = vmatpush.bf16.msra.mxu0 %v433
  %554 = vmatpush.bf16.msra.mxu0 %v432
  %555 = vmatpush.bf16.msra.mxu0 %v431
  %556 = vmatpush.bf16.msra.mxu0 %v430
  %557 = vmatpush.bf16.msra.mxu0 %v429
  %558 = vmatpush.bf16.msra.mxu0 %v428
  %559 = vmatmul.bf16.gmra.mxu0 %v294
  %v560 = vpop.f32.mrf.mxu0
  %v561 = vadd.f32 %v100, %v560
  %v562 = vpop.f32.mrf.mxu0
  %v563 = vadd.f32 %v100, %v562
  %564 = vmatmul.bf16.gmra.mxu0 %v296
  %v565 = vpop.f32.mrf.mxu0
  %v566 = vadd.f32 %v100, %v565
  %v567 = vpop.f32.mrf.mxu0
  %v568 = vadd.f32 %v100, %v567
  %569 = vmatmul.bf16.gmra.mxu0 %v298
  %v570 = vpop.f32.mrf.mxu0
  %v571 = vadd.f32 %v100, %v570
  %v572 = vpop.f32.mrf.mxu0
  %v573 = vadd.f32 %v100, %v572
  %574 = vmatmul.bf16.gmra.mxu0 %v300
  %v575 = vpop.f32.mrf.mxu0
  %v576 = vadd.f32 %v100, %v575
  %v577 = vpop.f32.mrf.mxu0
  %v578 = vadd.f32 %v100, %v577
  %579 = vmatmul.bf16.gmra.mxu0 %v302
  %v580 = vpop.f32.mrf.mxu0
  %v581 = vadd.f32 %v100, %v580
  %v582 = vpop.f32.mrf.mxu0
  %v583 = vadd.f32 %v100, %v582
  %584 = vmatmul.bf16.gmra.mxu0 %v304
  %v585 = vpop.f32.mrf.mxu0
  %v586 = vadd.f32 %v100, %v585
  %v587 = vpop.f32.mrf.mxu0
  %v588 = vadd.f32 %v100, %v587
  %589 = vmatmul.bf16.gmra.mxu0 %v306
  %v590 = vpop.f32.mrf.mxu0
  %v591 = vadd.f32 %v100, %v590
  %v592 = vpop.f32.mrf.mxu0
  %v593 = vadd.f32 %v100, %v592
  %594 = vmatmul.bf16.gmra.mxu0 %v308
  %v595 = vpop.f32.mrf.mxu0
  %v596 = vadd.f32 %v100, %v595
  %v597 = vpop.f32.mrf.mxu0
  %v598 = vadd.f32 %v100, %v597
  %599 = vmatmul.bf16.gmra.mxu0 %v310
  %v600 = vpop.f32.mrf.mxu0
  %v601 = vadd.f32 %v100, %v600
  %v602 = vpop.f32.mrf.mxu0
  %v603 = vadd.f32 %v100, %v602
  %604 = vmatmul.bf16.gmra.mxu0 %v312
  %v605 = vpop.f32.mrf.mxu0
  %v606 = vadd.f32 %v100, %v605
  %v607 = vpop.f32.mrf.mxu0
  %v608 = vadd.f32 %v100, %v607
  %609 = vmatmul.bf16.gmra.mxu0 %v314
  %v610 = vpop.f32.mrf.mxu0
  %v611 = vadd.f32 %v100, %v610
  %v612 = vpop.f32.mrf.mxu0
  %v613 = vadd.f32 %v100, %v612
  %614 = vmatmul.bf16.gmra.mxu0 %v316
  %v615 = vpop.f32.mrf.mxu0
  %v616 = vadd.f32 %v100, %v615
  %v617 = vpop.f32.mrf.mxu0
  %v618 = vadd.f32 %v100, %v617
  %619 = vmatmul.bf16.gmra.mxu0 %v318
  %v620 = vpop.f32.mrf.mxu0
  %v621 = vadd.f32 %v100, %v620
  %v622 = vpop.f32.mrf.mxu0
  %v623 = vadd.f32 %v100, %v622
  %624 = vmatmul.bf16.gmra.mxu0 %v320
  %v625 = vpop.f32.mrf.mxu0
  %v626 = vadd.f32 %v100, %v625
  %v627 = vpop.f32.mrf.mxu0
  %v628 = vadd.f32 %v100, %v627
  %629 = vmatmul.bf16.gmra.mxu0 %v322
  %v630 = vpop.f32.mrf.mxu0
  %v631 = vadd.f32 %v100, %v630
  %v632 = vpop.f32.mrf.mxu0
  %v633 = vadd.f32 %v100, %v632
  %634 = vmatmul.bf16.gmra.mxu0 %v324
  %v635 = vpop.f32.mrf.mxu0
  %v636 = vadd.f32 %v100, %v635
  %v637 = vpop.f32.mrf.mxu0
  %v638 = vadd.f32 %v100, %v637
  %639 = vmatmul.bf16.gmra.mxu0 %v326
  %v640 = vpop.f32.mrf.mxu0
  %v641 = vadd.f32 %v100, %v640
  %v642 = vpop.f32.mrf.mxu0
  %v643 = vadd.f32 %v100, %v642
  %644 = vmatmul.bf16.gmra.mxu0 %v328
  %v645 = vpop.f32.mrf.mxu0
  %v646 = vadd.f32 %v100, %v645
  %v647 = vpop.f32.mrf.mxu0
  %v648 = vadd.f32 %v100, %v647
  %649 = vmatmul.bf16.gmra.mxu0 %v330
  %v650 = vpop.f32.mrf.mxu0
  %v651 = vadd.f32 %v100, %v650
  %v652 = vpop.f32.mrf.mxu0
  %v653 = vadd.f32 %v100, %v652
  %654 = vmatmul.bf16.gmra.mxu0 %v332
  %v655 = vpop.f32.mrf.mxu0
  %v656 = vadd.f32 %v100, %v655
  %v657 = vpop.f32.mrf.mxu0
  %v658 = vadd.f32 %v100, %v657
  %659 = vmatmul.bf16.gmra.mxu0 %v334
  %v660 = vpop.f32.mrf.mxu0
  %v661 = vadd.f32 %v100, %v660
  %v662 = vpop.f32.mrf.mxu0
  %v663 = vadd.f32 %v100, %v662
  %664 = vmatmul.bf16.gmra.mxu0 %v336
  %v665 = vpop.f32.mrf.mxu0
  %v666 = vadd.f32 %v100, %v665
  %v667 = vpop.f32.mrf.mxu0
  %v668 = vadd.f32 %v100, %v667
  %669 = vmatmul.bf16.gmra.mxu0 %v338
  %v670 = vpop.f32.mrf.mxu0
  %v671 = vadd.f32 %v100, %v670
  %v672 = vpop.f32.mrf.mxu0
  %v673 = vadd.f32 %v100, %v672
  %674 = vmatmul.bf16.gmra.mxu0 %v340
  %v675 = vpop.f32.mrf.mxu0
  %v676 = vadd.f32 %v100, %v675
  %v677 = vpop.f32.mrf.mxu0
  %v678 = vadd.f32 %v100, %v677
  %679 = vmatmul.bf16.gmra.mxu0 %v342
  %v680 = vpop.f32.mrf.mxu0
  %v681 = vadd.f32 %v100, %v680
  %v682 = vpop.f32.mrf.mxu0
  %v683 = vadd.f32 %v100, %v682
  %684 = vmatmul.bf16.gmra.mxu0 %v344
  %v685 = vpop.f32.mrf.mxu0
  %v686 = vadd.f32 %v100, %v685
  %v687 = vpop.f32.mrf.mxu0
  %v688 = vadd.f32 %v100, %v687
  %689 = vmatmul.bf16.gmra.mxu0 %v346
  %v690 = vpop.f32.mrf.mxu0
  %v691 = vadd.f32 %v100, %v690
  %v692 = vpop.f32.mrf.mxu0
  %v693 = vadd.f32 %v100, %v692
  %694 = vmatmul.bf16.gmra.mxu0 %v348
  %v695 = vpop.f32.mrf.mxu0
  %v696 = vadd.f32 %v100, %v695
  %v697 = vpop.f32.mrf.mxu0
  %v698 = vadd.f32 %v100, %v697
  %699 = vmatmul.bf16.gmra.mxu0 %v350
  %v700 = vpop.f32.mrf.mxu0
  %v701 = vadd.f32 %v100, %v700
  %v702 = vpop.f32.mrf.mxu0
  %v703 = vadd.f32 %v100, %v702
  %704 = vmatmul.bf16.gmra.mxu0 %v352
  %v705 = vpop.f32.mrf.mxu0
  %v706 = vadd.f32 %v100, %v705
  %v707 = vpop.f32.mrf.mxu0
  %v708 = vadd.f32 %v100, %v707
  %709 = vmatmul.bf16.gmra.mxu0 %v354
  %v710 = vpop.f32.mrf.mxu0
  %v711 = vadd.f32 %v100, %v710
  %v712 = vpop.f32.mrf.mxu0
  %v713 = vadd.f32 %v100, %v712
  %714 = vmatmul.bf16.gmra.mxu0 %v356
  %v715 = vpop.f32.mrf.mxu0
  %v716 = vadd.f32 %v100, %v715
  %v717 = vpop.f32.mrf.mxu0
  %v718 = vadd.f32 %v100, %v717
  %719 = vdwg.mxu0
  %720 = vmatpush.bf16.msra.mxu0 0
  %721 = vmatpush.bf16.msra.mxu0 0
  %722 = vmatpush.bf16.msra.mxu0 0
  %723 = vmatpush.bf16.msra.mxu0 0
  %724 = vmatpush.bf16.msra.mxu0 0
  %725 = vmatpush.bf16.msra.mxu0 0
  %726 = vmatpush.bf16.msra.mxu0 %v549
  %727 = vmatpush.bf16.msra.mxu0 %v436
  %728 = vmatmul.bf16.gmra.mxu0 %v449
  %v729 = vpop.f32.mrf.mxu0
  %v730 = vadd.f32 %v561, %v729
  %v731 = vpop.f32.mrf.mxu0
  %v732 = vadd.f32 %v563, %v731
  %733 = vmatmul.bf16.gmra.mxu0 %v452
  %v734 = vpop.f32.mrf.mxu0
  %v735 = vadd.f32 %v566, %v734
  %v736 = vpop.f32.mrf.mxu0
  %v737 = vadd.f32 %v568, %v736
  %738 = vmatmul.bf16.gmra.mxu0 %v455
  %v739 = vpop.f32.mrf.mxu0
  %v740 = vadd.f32 %v571, %v739
  %v741 = vpop.f32.mrf.mxu0
  %v742 = vadd.f32 %v573, %v741
  %743 = vmatmul.bf16.gmra.mxu0 %v458
  %v744 = vpop.f32.mrf.mxu0
  %v745 = vadd.f32 %v576, %v744
  %v746 = vpop.f32.mrf.mxu0
  %v747 = vadd.f32 %v578, %v746
  %748 = vmatmul.bf16.gmra.mxu0 %v461
  %v749 = vpop.f32.mrf.mxu0
  %v750 = vadd.f32 %v581, %v749
  %v751 = vpop.f32.mrf.mxu0
  %v752 = vadd.f32 %v583, %v751
  %753 = vmatmul.bf16.gmra.mxu0 %v464
  %v754 = vpop.f32.mrf.mxu0
  %v755 = vadd.f32 %v586, %v754
  %v756 = vpop.f32.mrf.mxu0
  %v757 = vadd.f32 %v588, %v756
  %758 = vmatmul.bf16.gmra.mxu0 %v467
  %v759 = vpop.f32.mrf.mxu0
  %v760 = vadd.f32 %v591, %v759
  %v761 = vpop.f32.mrf.mxu0
  %v762 = vadd.f32 %v593, %v761
  %763 = vmatmul.bf16.gmra.mxu0 %v470
  %v764 = vpop.f32.mrf.mxu0
  %v765 = vadd.f32 %v596, %v764
  %v766 = vpop.f32.mrf.mxu0
  %v767 = vadd.f32 %v598, %v766
  %768 = vmatmul.bf16.gmra.mxu0 %v473
  %v769 = vpop.f32.mrf.mxu0
  %v770 = vadd.f32 %v601, %v769
  %v771 = vpop.f32.mrf.mxu0
  %v772 = vadd.f32 %v603, %v771
  %773 = vmatmul.bf16.gmra.mxu0 %v476
  %v774 = vpop.f32.mrf.mxu0
  %v775 = vadd.f32 %v606, %v774
  %v776 = vpop.f32.mrf.mxu0
  %v777 = vadd.f32 %v608, %v776
  %778 = vmatmul.bf16.gmra.mxu0 %v479
  %v779 = vpop.f32.mrf.mxu0
  %v780 = vadd.f32 %v611, %v779
  %v781 = vpop.f32.mrf.mxu0
  %v782 = vadd.f32 %v613, %v781
  %783 = vmatmul.bf16.gmra.mxu0 %v482
  %v784 = vpop.f32.mrf.mxu0
  %v785 = vadd.f32 %v616, %v784
  %v786 = vpop.f32.mrf.mxu0
  %v787 = vadd.f32 %v618, %v786
  %788 = vmatmul.bf16.gmra.mxu0 %v485
  %v789 = vpop.f32.mrf.mxu0
  %v790 = vadd.f32 %v621, %v789
  %v791 = vpop.f32.mrf.mxu0
  %v792 = vadd.f32 %v623, %v791
  %793 = vmatmul.bf16.gmra.mxu0 %v488
  %v794 = vpop.f32.mrf.mxu0
  %v795 = vadd.f32 %v626, %v794
  %v796 = vpop.f32.mrf.mxu0
  %v797 = vadd.f32 %v628, %v796
  %798 = vmatmul.bf16.gmra.mxu0 %v491
  %v799 = vpop.f32.mrf.mxu0
  %v800 = vadd.f32 %v631, %v799
  %v801 = vpop.f32.mrf.mxu0
  %v802 = vadd.f32 %v633, %v801
  %803 = vmatmul.bf16.gmra.mxu0 %v494
  %v804 = vpop.f32.mrf.mxu0
  %v805 = vadd.f32 %v636, %v804
  %v806 = vpop.f32.mrf.mxu0
  %v807 = vadd.f32 %v638, %v806
  %808 = vmatmul.bf16.gmra.mxu0 %v497
  %v809 = vpop.f32.mrf.mxu0
  %v810 = vadd.f32 %v641, %v809
  %v811 = vpop.f32.mrf.mxu0
  %v812 = vadd.f32 %v643, %v811
  %813 = vmatmul.bf16.gmra.mxu0 %v500
  %v814 = vpop.f32.mrf.mxu0
  %v815 = vadd.f32 %v646, %v814
  %v816 = vpop.f32.mrf.mxu0
  %v817 = vadd.f32 %v648, %v816
  %818 = vmatmul.bf16.gmra.mxu0 %v503
  %v819 = vpop.f32.mrf.mxu0
  %v820 = vadd.f32 %v651, %v819
  %v821 = vpop.f32.mrf.mxu0
  %v822 = vadd.f32 %v653, %v821
  %823 = vmatmul.bf16.gmra.mxu0 %v506
  %v824 = vpop.f32.mrf.mxu0
  %v825 = vadd.f32 %v656, %v824
  %v826 = vpop.f32.mrf.mxu0
  %v827 = vadd.f32 %v658, %v826
  %828 = vmatmul.bf16.gmra.mxu0 %v509
  %v829 = vpop.f32.mrf.mxu0
  %v830 = vadd.f32 %v661, %v829
  %v831 = vpop.f32.mrf.mxu0
  %v832 = vadd.f32 %v663, %v831
  %833 = vmatmul.bf16.gmra.mxu0 %v512
  %v834 = vpop.f32.mrf.mxu0
  %v835 = vadd.f32 %v666, %v834
  %v836 = vpop.f32.mrf.mxu0
  %v837 = vadd.f32 %v668, %v836
  %838 = vmatmul.bf16.gmra.mxu0 %v515
  %v839 = vpop.f32.mrf.mxu0
  %v840 = vadd.f32 %v671, %v839
  %v841 = vpop.f32.mrf.mxu0
  %v842 = vadd.f32 %v673, %v841
  %843 = vmatmul.bf16.gmra.mxu0 %v518
  %v844 = vpop.f32.mrf.mxu0
  %v845 = vadd.f32 %v676, %v844
  %v846 = vpop.f32.mrf.mxu0
  %v847 = vadd.f32 %v678, %v846
  %848 = vmatmul.bf16.gmra.mxu0 %v521
  %v849 = vpop.f32.mrf.mxu0
  %v850 = vadd.f32 %v681, %v849
  %v851 = vpop.f32.mrf.mxu0
  %v852 = vadd.f32 %v683, %v851
  %853 = vmatmul.bf16.gmra.mxu0 %v524
  %v854 = vpop.f32.mrf.mxu0
  %v855 = vadd.f32 %v686, %v854
  %v856 = vpop.f32.mrf.mxu0
  %v857 = vadd.f32 %v688, %v856
  %858 = vmatmul.bf16.gmra.mxu0 %v527
  %v859 = vpop.f32.mrf.mxu0
  %v860 = vadd.f32 %v691, %v859
  %v861 = vpop.f32.mrf.mxu0
  %v862 = vadd.f32 %v693, %v861
  %863 = vmatmul.bf16.gmra.mxu0 %v530
  %v864 = vpop.f32.mrf.mxu0
  %v865 = vadd.f32 %v696, %v864
  %v866 = vpop.f32.mrf.mxu0
  %v867 = vadd.f32 %v698, %v866
  %868 = vmatmul.bf16.gmra.mxu0 %v533
  %v869 = vpop.f32.mrf.mxu0
  %v870 = vadd.f32 %v701, %v869
  %v871 = vpop.f32.mrf.mxu0
  %v872 = vadd.f32 %v703, %v871
  %873 = vmatmul.bf16.gmra.mxu0 %v536
  %v874 = vpop.f32.mrf.mxu0
  %v875 = vadd.f32 %v706, %v874
  %v876 = vpop.f32.mrf.mxu0
  %v877 = vadd.f32 %v708, %v876
  %878 = vmatmul.bf16.gmra.mxu0 %v539
  %v879 = vpop.f32.mrf.mxu0
  %v880 = vadd.f32 %v711, %v879
  %v881 = vpop.f32.mrf.mxu0
  %v882 = vadd.f32 %v713, %v881
  %883 = vmatmul.bf16.gmra.mxu0 %v542
  %v884 = vpop.f32.mrf.mxu0
  %v885 = vadd.f32 %v716, %v884
  %v886 = vpop.f32.mrf.mxu0
  %v887 = vadd.f32 %v718, %v886
  %888 = vdwg.mxu0
  %v889 = vmax.f32 %v730, 0.0
  %v890 = vmax.f32 %v732, 0.0
  %v891 = vmax.f32 %v735, 0.0
  %v892 = vmax.f32 %v737, 0.0
  %v893 = vmax.f32 %v740, 0.0
  %v894 = vmax.f32 %v742, 0.0
  %v895 = vmax.f32 %v745, 0.0
  %v896 = vmax.f32 %v747, 0.0
  %v897 = vmax.f32 %v750, 0.0
  %v898 = vmax.f32 %v752, 0.0
  %v899 = vmax.f32 %v755, 0.0
  %v900 = vmax.f32 %v757, 0.0
  %v901 = vmax.f32 %v760, 0.0
  %v902 = vmax.f32 %v762, 0.0
  %v903 = vmax.f32 %v765, 0.0
  %v904 = vmax.f32 %v767, 0.0
  %v905 = vmax.f32 %v770, 0.0
  %v906 = vmax.f32 %v772, 0.0
  %v907 = vmax.f32 %v775, 0.0
  %v908 = vmax.f32 %v777, 0.0
  %v909 = vmax.f32 %v780, 0.0
  %v910 = vmax.f32 %v782, 0.0
  %v911 = vmax.f32 %v785, 0.0
  %v912 = vmax.f32 %v787, 0.0
  %v913 = vmax.f32 %v790, 0.0
  %v914 = vmax.f32 %v792, 0.0
  %v915 = vmax.f32 %v795, 0.0
  %v916 = vmax.f32 %v797, 0.0
  %v917 = vmax.f32 %v800, 0.0
  %v918 = vmax.f32 %v802, 0.0
  %v919 = vmax.f32 %v805, 0.0
  %v920 = vmax.f32 %v807, 0.0
  %v921 = vmax.f32 %v810, 0.0
  %v922 = vmax.f32 %v812, 0.0
  %v923 = vmax.f32 %v815, 0.0
  %v924 = vmax.f32 %v817, 0.0
  %v925 = vmax.f32 %v820, 0.0
  %v926 = vmax.f32 %v822, 0.0
  %v927 = vmax.f32 %v825, 0.0
  %v928 = vmax.f32 %v827, 0.0
  %v929 = vmax.f32 %v830, 0.0
  %v930 = vmax.f32 %v832, 0.0
  %v931 = vmax.f32 %v835, 0.0
  %v932 = vmax.f32 %v837, 0.0
  %v933 = vmax.f32 %v840, 0.0
  %v934 = vmax.f32 %v842, 0.0
  %v935 = vmax.f32 %v845, 0.0
  %v936 = vmax.f32 %v847, 0.0
  %v937 = vmax.f32 %v850, 0.0
  %v938 = vmax.f32 %v852, 0.0
  %v939 = vmax.f32 %v855, 0.0
  %v940 = vmax.f32 %v857, 0.0
  %v941 = vmax.f32 %v860, 0.0
  %v942 = vmax.f32 %v862, 0.0
  %v943 = vmax.f32 %v865, 0.0
  %v944 = vmax.f32 %v867, 0.0
  %v945 = vmax.f32 %v870, 0.0
  %v946 = vmax.f32 %v872, 0.0
  %v947 = vmax.f32 %v875, 0.0
  %v948 = vmax.f32 %v877, 0.0
  %v949 = vmax.f32 %v880, 0.0
  %v950 = vmax.f32 %v882, 0.0
  %v951 = vmax.f32 %v885, 0.0
  %v952 = vmax.f32 %v887, 0.0
  %v953 = vpack.c.bf16 %v889, %v889
  %v954 = vpack.c.bf16 %v890, %v890
  %v955 = vpack.c.bf16 %v891, %v891
  %v956 = vpack.c.bf16 %v892, %v892
  %v957 = vpack.c.bf16 %v893, %v893
  %v958 = vpack.c.bf16 %v894, %v894
  %v959 = vpack.c.bf16 %v895, %v895
  %v960 = vpack.c.bf16 %v896, %v896
  %v961 = vpack.c.bf16 %v897, %v897
  %v962 = vpack.c.bf16 %v898, %v898
  %v963 = vpack.c.bf16 %v899, %v899
  %v964 = vpack.c.bf16 %v900, %v900
  %v965 = vpack.c.bf16 %v901, %v901
  %v966 = vpack.c.bf16 %v902, %v902
  %v967 = vpack.c.bf16 %v903, %v903
  %v968 = vpack.c.bf16 %v904, %v904
  %v969 = vpack.c.bf16 %v905, %v905
  %v970 = vpack.c.bf16 %v906, %v906
  %v971 = vpack.c.bf16 %v907, %v907
  %v972 = vpack.c.bf16 %v908, %v908
  %v973 = vpack.c.bf16 %v909, %v909
  %v974 = vpack.c.bf16 %v910, %v910
  %v975 = vpack.c.bf16 %v911, %v911
  %v976 = vpack.c.bf16 %v912, %v912
  %v977 = vpack.c.bf16 %v913, %v913
  %v978 = vpack.c.bf16 %v914, %v914
  %v979 = vpack.c.bf16 %v915, %v915
  %v980 = vpack.c.bf16 %v916, %v916
  %v981 = vpack.c.bf16 %v917, %v917
  %v982 = vpack.c.bf16 %v918, %v918
  %v983 = vpack.c.bf16 %v919, %v919
  %v984 = vpack.c.bf16 %v920, %v920
  %v985 = vpack.c.bf16 %v921, %v921
  %v986 = vpack.c.bf16 %v922, %v922
  %v987 = vpack.c.bf16 %v923, %v923
  %v988 = vpack.c.bf16 %v924, %v924
  %v989 = vpack.c.bf16 %v925, %v925
  %v990 = vpack.c.bf16 %v926, %v926
  %v991 = vpack.c.bf16 %v927, %v927
  %v992 = vpack.c.bf16 %v928, %v928
  %v993 = vpack.c.bf16 %v929, %v929
  %v994 = vpack.c.bf16 %v930, %v930
  %v995 = vpack.c.bf16 %v931, %v931
  %v996 = vpack.c.bf16 %v932, %v932
  %v997 = vpack.c.bf16 %v933, %v933
  %v998 = vpack.c.bf16 %v934, %v934
  %v999 = vpack.c.bf16 %v935, %v935
  %v1000 = vpack.c.bf16 %v936, %v936
  %v1001 = vpack.c.bf16 %v937, %v937
  %v1002 = vpack.c.bf16 %v938, %v938
  %v1003 = vpack.c.bf16 %v939, %v939
  %v1004 = vpack.c.bf16 %v940, %v940
  %v1005 = vpack.c.bf16 %v941, %v941
  %v1006 = vpack.c.bf16 %v942, %v942
  %v1007 = vpack.c.bf16 %v943, %v943
  %v1008 = vpack.c.bf16 %v944, %v944
  %v1009 = vpack.c.bf16 %v945, %v945
  %v1010 = vpack.c.bf16 %v946, %v946
  %v1011 = vpack.c.bf16 %v947, %v947
  %v1012 = vpack.c.bf16 %v948, %v948
  %v1013 = vpack.c.bf16 %v949, %v949
  %v1014 = vpack.c.bf16 %v950, %v950
  %v1015 = vpack.c.bf16 %v951, %v951
  %v1016 = vpack.c.bf16 %v952, %v952
  %1017 = vst [vmem:[%s3] sm:$0xf] %v953
  %1018 = vst [vmem:[%s3 + $0x4] sm:$0xf] %v954
  %1019 = vst [vmem:[%s3 + $0x8] sm:$0xf] %v955
  %1020 = vst [vmem:[%s3 + $0xc] sm:$0xf] %v956
  %1021 = vst [vmem:[%s3 + $0x10] sm:$0xf] %v957
  %1022 = vst [vmem:[%s3 + $0x14] sm:$0xf] %v958
  %1023 = vst [vmem:[%s3 + $0x18] sm:$0xf] %v959
  %1024 = vst [vmem:[%s3 + $0x1c] sm:$0xf] %v960
  %1025 = vst [vmem:[%s3 + $0x20] sm:$0xf] %v961
  %1026 = vst [vmem:[%s3 + $0x24] sm:$0xf] %v962
  %1027 = vst [vmem:[%s3 + $0x28] sm:$0xf] %v963
  %1028 = vst [vmem:[%s3 + $0x2c] sm:$0xf] %v964
  %1029 = vst [vmem:[%s3 + $0x30] sm:$0xf] %v965
  %1030 = vst [vmem:[%s3 + $0x34] sm:$0xf] %v966
  %1031 = vst [vmem:[%s3 + $0x38] sm:$0xf] %v967
  %1032 = vst [vmem:[%s3 + $0x3c] sm:$0xf] %v968
  %1033 = vst [vmem:[%s3 + $0x40] sm:$0xf] %v969
  %1034 = vst [vmem:[%s3 + $0x44] sm:$0xf] %v970
  %1035 = vst [vmem:[%s3 + $0x48] sm:$0xf] %v971
  %1036 = vst [vmem:[%s3 + $0x4c] sm:$0xf] %v972
  %1037 = vst [vmem:[%s3 + $0x50] sm:$0xf] %v973
  %1038 = vst [vmem:[%s3 + $0x54] sm:$0xf] %v974
  %1039 = vst [vmem:[%s3 + $0x58] sm:$0xf] %v975
  %1040 = vst [vmem:[%s3 + $0x5c] sm:$0xf] %v976
  %1041 = vst [vmem:[%s3 + $0x60] sm:$0xf] %v977
  %1042 = vst [vmem:[%s3 + $0x64] sm:$0xf] %v978
  %1043 = vst [vmem:[%s3 + $0x68] sm:$0xf] %v979
  %1044 = vst [vmem:[%s3 + $0x6c] sm:$0xf] %v980
  %1045 = vst [vmem:[%s3 + $0x70] sm:$0xf] %v981
  %1046 = vst [vmem:[%s3 + $0x74] sm:$0xf] %v982
  %1047 = vst [vmem:[%s3 + $0x78] sm:$0xf] %v983
  %1048 = vst [vmem:[%s3 + $0x7c] sm:$0xf] %v984
  %1049 = vst [vmem:[%s3 + $0x80] sm:$0xf] %v985
  %1050 = vst [vmem:[%s3 + $0x84] sm:$0xf] %v986
  %1051 = vst [vmem:[%s3 + $0x88] sm:$0xf] %v987
  %1052 = vst [vmem:[%s3 + $0x8c] sm:$0xf] %v988
  %1053 = vst [vmem:[%s3 + $0x90] sm:$0xf] %v989
  %1054 = vst [vmem:[%s3 + $0x94] sm:$0xf] %v990
  %1055 = vst [vmem:[%s3 + $0x98] sm:$0xf] %v991
  %1056 = vst [vmem:[%s3 + $0x9c] sm:$0xf] %v992
  %1057 = vst [vmem:[%s3 + $0xa0] sm:$0xf] %v993
  %1058 = vst [vmem:[%s3 + $0xa4] sm:$0xf] %v994
  %1059 = vst [vmem:[%s3 + $0xa8] sm:$0xf] %v995
  %1060 = vst [vmem:[%s3 + $0xac] sm:$0xf] %v996
  %1061 = vst [vmem:[%s3 + $0xb0] sm:$0xf] %v997
  %1062 = vst [vmem:[%s3 + $0xb4] sm:$0xf] %v998
  %1063 = vst [vmem:[%s3 + $0xb8] sm:$0xf] %v999
  %1064 = vst [vmem:[%s3 + $0xbc] sm:$0xf] %v1000
  %1065 = vst [vmem:[%s3 + $0xc0] sm:$0xf] %v1001
  %1066 = vst [vmem:[%s3 + $0xc4] sm:$0xf] %v1002
  %1067 = vst [vmem:[%s3 + $0xc8] sm:$0xf] %v1003
  %1068 = vst [vmem:[%s3 + $0xcc] sm:$0xf] %v1004
  %1069 = vst [vmem:[%s3 + $0xd0] sm:$0xf] %v1005
  %1070 = vst [vmem:[%s3 + $0xd4] sm:$0xf] %v1006
  %1071 = vst [vmem:[%s3 + $0xd8] sm:$0xf] %v1007
  %1072 = vst [vmem:[%s3 + $0xdc] sm:$0xf] %v1008
  %1073 = vst [vmem:[%s3 + $0xe0] sm:$0xf] %v1009
  %1074 = vst [vmem:[%s3 + $0xe4] sm:$0xf] %v1010
  %1075 = vst [vmem:[%s3 + $0xe8] sm:$0xf] %v1011
  %1076 = vst [vmem:[%s3 + $0xec] sm:$0xf] %v1012
  %1077 = vst [vmem:[%s3 + $0xf0] sm:$0xf] %v1013
  %1078 = vst [vmem:[%s3 + $0xf4] sm:$0xf] %v1014
  %1079 = vst [vmem:[%s3 + $0xf8] sm:$0xf] %v1015
  %1080 = vst [vmem:[%s3 + $0xfc] sm:$0xf] %v1016
  // Predicated region
  $region14: #{vision_encoder_forward.2} parent=0 // pred_check
    _
  $region15: #{vision_encoder_forward.2} parent=0 // pred_check_branch
    %1082 = sbr.rel (0) target = $region17
  $region16: #{vision_encoder_forward.2} parent=0 // pred_region
    _
  $region17: #{vision_encoder_forward.2} parent=0 // pred_fallthru
    _
  // Predicated region
  $region18: #{vision_encoder_forward.2} parent=0 // pred_check
    _
  $region19: #{vision_encoder_forward.2} parent=0 // pred_check_branch
    %1084 = sbr.rel (0) target = $region21
  $region20: #{vision_encoder_forward.2} parent=0 // pred_region
    _
  $region21: #{vision_encoder_forward.2} parent=0 // pred_fallthru
    _

// kernel: vision_encoder_forward.3
$region0: #{vision_encoder_forward.3}
  #allocation0 [shape = 'u32[]', space=smem, size = 0x4, offset = 0x4, fixed_abs, tag = 'smem constant byte address 0x4 - core index']
  #allocation1 [shape = 'u32[72,128]{1,0:T(1,128)}', space=vmem, size = 0x9000, scoped, tag = 'internal scratch']
  %s0 = inlined_call_operand.vmem [shape: bf16[2,2,2,8,8,128], index: 0, kind: input, shape index: {}]
  %s1 = inlined_call_operand.vmem [shape: bf16[9,128,128], index: 1, kind: input, shape index: {}]
  %s2 = inlined_call_operand.vmem [shape: f32[1,128], index: 2, kind: input, shape index: {}]
  %s3 = inlined_call_operand.vmem [shape: f32[128,32], index: 3, kind: input, shape index: {}]
  %s4 = inlined_call_operand.vmem [shape: f32[1,32], index: 4, kind: input, shape index: {}]
  %s5 = inlined_call_operand.hbm [shape: f32[2,1,32], index: 5, kind: output, shape index: {}]
  %s6 = sld [smem:[#allocation0]]
  $region53: #{vision_encoder_forward.3} parent=0
    _
  %s8 = ssub.s32 1, %s6
  %s9 = scalar_select 0, %s8, %s6
  $region1: #{vision_encoder_forward.3} parent=0
    #allocation2 [shape = 'u8[1024]{0}', space=vmem, size = 0x400, scoped, tag = 'output window, operand 0']
    #allocation3 [shape = 's32[2]{0}', space=sflag, size = 0x8, scoped, tag = 'scoped memory for vision_encoder_forward.3']
    %10 = vsyncpa [#allocation3], 0
    %s11 = scalar_lea.sflag [#allocation3], 1
    %12 = vsyncpa %s11, 0
    loop: start=0, step=1, limit=4
    $region2: #{vision_encoder_forward.3} parent=1 // loop_pre_header
      _
    $region3: #{vision_encoder_forward.3} parent=1 // loop_header
      %s14 = sphi 0, %s18
      %p15 = scmp.ge.s32.totalorder %s14, 4
      %s24 = sphi 0, %s26
      %s27 = sphi 0, %s24
      %s28 = sphi 0, %s27
      %s44 = sphi 0, %s28
      %s48 = sphi 0, %s48
      %s50 = sphi 0, %s48
      %s51 = sphi 0, %s50
      %s65 = sphi 0, %s51
      %s69 = sphi 0, %s69
      %s71 = sphi 0, %s69
      %s72 = sphi 0, %s71
      %s86 = sphi 0, %s72
      %s90 = sphi 0, %s90
      %s92 = sphi 0, %s90
      %s93 = sphi 0, %s92
      %s107 = sphi 0, %s93
      %s111 = sphi 0, %s111
      %s113 = sphi 0, %s111
      %s114 = sphi 0, %s113
      %s128 = sphi 0, %s114
      %s134 = sphi 0, %s136
      %s137 = sphi 0, %s134
      %s138 = sphi 0, %s137
      %s154 = sphi 0, %s138
    $region4: #{vision_encoder_forward.3} parent=1 // loop_header_branch
      %17 = sbr.rel (%p15) target = $region8
    $region5: #{vision_encoder_forward.3} parent=1 // loop_body
      %s19 = ssub.s32 %s14, 1
      %s20 = ssub.s32 %s14, 2
      %s21 = sadd.s32 %s14, 1
      %s22 = ssub.s32 %s14, %s21
      %p23 = scmp.eq.s32.totalorder %s22, 0
      %s25 = sadd.s32 %s24, 1
      %s26 = scalar_select %p23, %s24, %s25
      %p29 = pneg %p23
      %p30 = scmp.eq.s32.totalorder %s14, 1
      %p31 = por %p29, %p30
      %p32 = scmp.ne.s32.totalorder %s24, %s27
      %p33 = scmp.eq.s32.totalorder %s14, 0
      %p34 = por %p32, %p33
      %p35 = scmp.ne.s32.totalorder %s24, %s27
      %p36 = scmp.eq.s32.totalorder %s19, 1
      %p37 = por %p35, %p36
      %p38 = scmp.ne.s32.totalorder %s27, %s28
      %p39 = scmp.eq.s32.totalorder %s19, 0
      %p40 = por %p38, %p39
      %p41 = scmp.ne.s32.totalorder %s27, %s28
      %p42 = scmp.eq.s32.totalorder %s20, 1
      %p43 = por %p41, %p42
      %p45 = scmp.ne.s32.totalorder %s28, %s44
      %p46 = scmp.eq.s32.totalorder %s20, 0
      %p47 = por %p45, %p46
      %s49 = sadd.s32 %s48, 1
      %p52 = scmp.eq.s32.totalorder %s14, 1
      %p53 = scmp.ne.s32.totalorder %s48, %s50
      %p54 = scmp.eq.s32.totalorder %s14, 0
      %p55 = por %p53, %p54
      %p56 = scmp.ne.s32.totalorder %s48, %s50
      %p57 = scmp.eq.s32.totalorder %s19, 1
      %p58 = por %p56, %p57
      %p59 = scmp.ne.s32.totalorder %s50, %s51
      %p60 = scmp.eq.s32.totalorder %s19, 0
      %p61 = por %p59, %p60
      %p62 = scmp.ne.s32.totalorder %s50, %s51
      %p63 = scmp.eq.s32.totalorder %s20, 1
      %p64 = por %p62, %p63
      %p66 = scmp.ne.s32.totalorder %s51, %s65
      %p67 = scmp.eq.s32.totalorder %s20, 0
      %p68 = por %p66, %p67
      %s70 = sadd.s32 %s69, 1
      %p73 = scmp.eq.s32.totalorder %s14, 1
      %p74 = scmp.ne.s32.totalorder %s69, %s71
      %p75 = scmp.eq.s32.totalorder %s14, 0
      %p76 = por %p74, %p75
      %p77 = scmp.ne.s32.totalorder %s69, %s71
      %p78 = scmp.eq.s32.totalorder %s19, 1
      %p79 = por %p77, %p78
      %p80 = scmp.ne.s32.totalorder %s71, %s72
      %p81 = scmp.eq.s32.totalorder %s19, 0
      %p82 = por %p80, %p81
      %p83 = scmp.ne.s32.totalorder %s71, %s72
      %p84 = scmp.eq.s32.totalorder %s20, 1
      %p85 = por %p83, %p84
      %p87 = scmp.ne.s32.totalorder %s72, %s86
      %p88 = scmp.eq.s32.totalorder %s20, 0
      %p89 = por %p87, %p88
      %s91 = sadd.s32 %s90, 1
      %p94 = scmp.eq.s32.totalorder %s14, 1
      %p95 = scmp.ne.s32.totalorder %s90, %s92
      %p96 = scmp.eq.s32.totalorder %s14, 0
      %p97 = por %p95, %p96
      %p98 = scmp.ne.s32.totalorder %s90, %s92
      %p99 = scmp.eq.s32.totalorder %s19, 1
      %p100 = por %p98, %p99
      %p101 = scmp.ne.s32.totalorder %s92, %s93
      %p102 = scmp.eq.s32.totalorder %s19, 0
      %p103 = por %p101, %p102
      %p104 = scmp.ne.s32.totalorder %s92, %s93
      %p105 = scmp.eq.s32.totalorder %s20, 1
      %p106 = por %p104, %p105
      %p108 = scmp.ne.s32.totalorder %s93, %s107
      %p109 = scmp.eq.s32.totalorder %s20, 0
      %p110 = por %p108, %p109
      %s112 = sadd.s32 %s111, 1
      %p115 = scmp.eq.s32.totalorder %s14, 1
      %p116 = scmp.ne.s32.totalorder %s111, %s113
      %p117 = scmp.eq.s32.totalorder %s14, 0
      %p118 = por %p116, %p117
      %p119 = scmp.ne.s32.totalorder %s111, %s113
      %p120 = scmp.eq.s32.totalorder %s19, 1
      %p121 = por %p119, %p120
      %p122 = scmp.ne.s32.totalorder %s113, %s114
      %p123 = scmp.eq.s32.totalorder %s19, 0
      %p124 = por %p122, %p123
      %p125 = scmp.ne.s32.totalorder %s113, %s114
      %p126 = scmp.eq.s32.totalorder %s20, 1
      %p127 = por %p125, %p126
      %p129 = scmp.ne.s32.totalorder %s114, %s128
      %p130 = scmp.eq.s32.totalorder %s20, 0
      %p131 = por %p129, %p130
      %s132 = ssub.s32 %s14, %s21
      %p133 = scmp.eq.s32.totalorder %s132, 0
      %s135 = sadd.s32 %s134, 1
      %s136 = scalar_select %p133, %s134, %s135
      %p139 = pneg %p133
      %p140 = scmp.eq.s32.totalorder %s14, 1
      %p141 = por %p139, %p140
      %p142 = scmp.ne.s32.totalorder %s134, %s137
      %p143 = scmp.eq.s32.totalorder %s14, 0
      %p144 = por %p142, %p143
      %p145 = scmp.ne.s32.totalorder %s134, %s137
      %p146 = scmp.eq.s32.totalorder %s19, 1
      %p147 = por %p145, %p146
      %p148 = scmp.ne.s32.totalorder %s137, %s138
      %p149 = scmp.eq.s32.totalorder %s19, 0
      %p150 = por %p148, %p149
      %p151 = scmp.ne.s32.totalorder %s137, %s138
      %p152 = scmp.eq.s32.totalorder %s20, 1
      %p153 = por %p151, %p152
      %p155 = scmp.ne.s32.totalorder %s138, %s154
      %p156 = scmp.eq.s32.totalorder %s20, 0
      %p157 = por %p155, %p156
      %p158 = scmp.le.s32.totalorder 1, %s14
      %p159 = scmp.lt.s32.totalorder %s14, 3
      %p160 = pnand %p158, %p159
      %p161 = pneg %p160
      // Predicated region
      $region9: #{vision_encoder_forward.3} parent=5 // pred_check
        _
      $region10: #{vision_encoder_forward.3} parent=5 // pred_check_branch
        %163 = sbr.rel (%p160) target = $region12
      $region11: #{vision_encoder_forward.3} parent=5 // pred_region
        %s164 = ssub.s32 %s14, 1
        // Predicated region
        $region13: #{vision_encoder_forward.3} parent=11 // pred_check
          %p165 = pneg %p61
        $region14: #{vision_encoder_forward.3} parent=11 // pred_check_branch
          %167 = sbr.rel (%p165) target = $region16
        $region15: #{vision_encoder_forward.3} parent=11 // pred_region
          _
        $region16: #{vision_encoder_forward.3} parent=11 // pred_fallthru
          _
        // Predicated region
        $region17: #{vision_encoder_forward.3} parent=11 // pred_check
          %p168 = pneg %p82
        $region18: #{vision_encoder_forward.3} parent=11 // pred_check_branch
          %170 = sbr.rel (%p168) target = $region20
        $region19: #{vision_encoder_forward.3} parent=11 // pred_region
          _
        $region20: #{vision_encoder_forward.3} parent=11 // pred_fallthru
          _
        // Predicated region
        $region21: #{vision_encoder_forward.3} parent=11 // pred_check
          %p171 = pneg %p103
        $region22: #{vision_encoder_forward.3} parent=11 // pred_check_branch
          %173 = sbr.rel (%p171) target = $region24
        $region23: #{vision_encoder_forward.3} parent=11 // pred_region
          _
        $region24: #{vision_encoder_forward.3} parent=11 // pred_fallthru
          _
        // Predicated region
        $region25: #{vision_encoder_forward.3} parent=11 // pred_check
          %p174 = pneg %p124
        $region26: #{vision_encoder_forward.3} parent=11 // pred_check_branch
          %176 = sbr.rel (%p174) target = $region28
        $region27: #{vision_encoder_forward.3} parent=11 // pred_region
          _
        $region28: #{vision_encoder_forward.3} parent=11 // pred_fallthru
          _
      $region12: #{vision_encoder_forward.3} parent=5 // pred_fallthru
        _
      %p177 = scmp.lt.s32.totalorder %s14, 2
      // Predicated region
      $region29: #{vision_encoder_forward.3} parent=5 // pred_check
        %p178 = pneg %p177
      $region30: #{vision_encoder_forward.3} parent=5 // pred_check_branch
        %180 = sbr.rel (%p178) target = $region32
      $region31: #{vision_encoder_forward.3} parent=5 // pred_region
        // Predicated region
        $region33: #{vision_encoder_forward.3} parent=31 // pred_check
          %p181 = pneg %p34
        $region34: #{vision_encoder_forward.3} parent=31 // pred_check_branch
          %183 = sbr.rel (%p181) target = $region36
        $region35: #{vision_encoder_forward.3} parent=31 // pred_region
          %p184 = scmp.lt.s32.totalorder %s14, 1
          %s185 = scalar_select %p184, %s14, 1
          %s186 = smul.addr %s185, 32
          %s187 = smul.addr %s186, 4
          %s188 = scalar_lea.vmem %s0, %s187
        $region36: #{vision_encoder_forward.3} parent=31 // pred_fallthru
          _
      $region32: #{vision_encoder_forward.3} parent=5 // pred_fallthru
        _
      %p189 = scmp.le.s32.totalorder 1, %s14
      %p190 = scmp.lt.s32.totalorder %s14, 3
      %p191 = pnand %p189, %p190
      %p192 = pneg %p191
      // Predicated region
      $region37: #{vision_encoder_forward.3} parent=5 // pred_check
        _
      $region38: #{vision_encoder_forward.3} parent=5 // pred_check_branch
        %194 = sbr.rel (%p191) target = $region40
      $region39: #{vision_encoder_forward.3} parent=5 // pred_region
        %s195 = ssub.s32 %s14, 1
        %p196 = scmp.lt.s32.totalorder %s19, 1
        %s197 = scalar_select %p196, %s19, 1
        %s198 = smul.addr %s197, 32
        %s199 = smul.addr %s198, 4
        %s200 = scalar_lea.vmem %s0, %s199
        %p201 = pneg %p40
        %p202 = pneg %p37
        %p203 = pneg %p61
        %p204 = pneg %p58
        %p205 = pneg %p82
        %p206 = pneg %p79
        %p207 = pneg %p103
        %p208 = pneg %p100
        %p209 = pneg %p124
        %p210 = pneg %p121
        %p211 = pneg %p150
        %p212 = pneg %p147
        %s213 = sand.u32 %s137, 1
        %s214 = scalar_lea.sflag [#allocation3], %s213
        %s215 = sand.u32 %s137, 1
        %s216 = scalar_lea.vmem [#allocation2], %s215
        %p217 = scmp.lt.s32.totalorder %s19, 1
        %s218 = scalar_select %p217, %s19, 1
        %s219 = smul.addr %s218, 32
        %s220 = smul.addr %s219, 4
        %s221 = scalar_lea.vmem %s0, %s220
        %v223 = vld [vmem:[%s221] sm:$0xf]
        %v224 = vld [vmem:[%s221 + $0x4] sm:$0xf]
        %v225 = vld [vmem:[%s221 + $0x8] sm:$0xf]
        %v226 = vld [vmem:[%s221 + $0xc] sm:$0xf]
        %v227 = vld [vmem:[%s221 + $0x10] sm:$0xf]
        %v228 = vld [vmem:[%s221 + $0x14] sm:$0xf]
        %v229 = vld [vmem:[%s221 + $0x18] sm:$0xf]
        %v230 = vld [vmem:[%s221 + $0x1c] sm:$0xf]
        %s231 = scalar_lea.vmem %s221, 32
        %v232 = vld [vmem:[%s231] sm:$0xf]
        %v233 = vld [vmem:[%s231 + $0x4] sm:$0xf]
        %v234 = vld [vmem:[%s231 + $0x8] sm:$0xf]
        %v235 = vld [vmem:[%s231 + $0xc] sm:$0xf]
        %v236 = vld [vmem:[%s231 + $0x10] sm:$0xf]
        %v237 = vld [vmem:[%s231 + $0x14] sm:$0xf]
        %v238 = vld [vmem:[%s231 + $0x18] sm:$0xf]
        %v239 = vld [vmem:[%s231 + $0x1c] sm:$0xf]
        %s240 = scalar_lea.vmem %s221, 64
        %v241 = vld [vmem:[%s240] sm:$0xf]
        %v242 = vld [vmem:[%s240 + $0x4] sm:$0xf]
        %v243 = vld [vmem:[%s240 + $0x8] sm:$0xf]
        %v244 = vld [vmem:[%s240 + $0xc] sm:$0xf]
        %v245 = vld [vmem:[%s240 + $0x10] sm:$0xf]
        %v246 = vld [vmem:[%s240 + $0x14] sm:$0xf]
        %v247 = vld [vmem:[%s240 + $0x18] sm:$0xf]
        %v248 = vld [vmem:[%s240 + $0x1c] sm:$0xf]
        %s249 = scalar_lea.vmem %s221, 96
        %v250 = vld [vmem:[%s249] sm:$0xf]
        %v251 = vld [vmem:[%s249 + $0x4] sm:$0xf]
        %v252 = vld [vmem:[%s249 + $0x8] sm:$0xf]
        %v253 = vld [vmem:[%s249 + $0xc] sm:$0xf]
        %v254 = vld [vmem:[%s249 + $0x10] sm:$0xf]
        %v255 = vld [vmem:[%s249 + $0x14] sm:$0xf]
        %v256 = vld [vmem:[%s249 + $0x18] sm:$0xf]
        %v257 = vld [vmem:[%s249 + $0x1c] sm:$0xf]
        %v266 = vunpack.c.l.b16 %v232
        %v267 = vunpack.c.l.b16 %v233
        %v268 = vunpack.c.l.b16 %v234
        %v269 = vunpack.c.l.b16 %v235
        %v270 = vunpack.c.l.b16 %v236
        %v271 = vunpack.c.l.b16 %v237
        %v272 = vunpack.c.l.b16 %v238
        %v273 = vunpack.c.l.b16 %v239
        %v274 = vpack.c.b16 %v266, %v266
        %v275 = vpack.c.b16 %v267, %v267
        %v276 = vpack.c.b16 %v268, %v268
        %v277 = vpack.c.b16 %v269, %v269
        %v278 = vpack.c.b16 %v270, %v270
        %v279 = vpack.c.b16 %v271, %v271
        %v280 = vpack.c.b16 %v272, %v272
        %v281 = vpack.c.b16 %v273, %v273
        %v283 = vshrl.u32 %v274, 16
        %v285 = vrot.slane %v283, 7
        %v286 = vshll.u32 %v274, 16
        %v288 = vor.u32 %v285, %v286
        %v290 = vshrl.u32 %v275, 16
        %v292 = vrot.slane %v290, 7
        %v293 = vshll.u32 %v275, 16
        %v295 = vor.u32 %v292, %v293
        %v297 = vshrl.u32 %v276, 16
        %v299 = vrot.slane %v297, 7
        %v300 = vshll.u32 %v276, 16
        %v302 = vor.u32 %v299, %v300
        %v304 = vshrl.u32 %v277, 16
        %v306 = vrot.slane %v304, 7
        %v307 = vshll.u32 %v277, 16
        %v309 = vor.u32 %v306, %v307
        %v311 = vshrl.u32 %v278, 16
        %v313 = vrot.slane %v311, 7
        %v314 = vshll.u32 %v278, 16
        %v316 = vor.u32 %v313, %v314
        %v318 = vshrl.u32 %v279, 16
        %v320 = vrot.slane %v318, 7
        %v321 = vshll.u32 %v279, 16
        %v323 = vor.u32 %v320, %v321
        %v325 = vshrl.u32 %v280, 16
        %v327 = vrot.slane %v325, 7
        %v328 = vshll.u32 %v280, 16
        %v330 = vor.u32 %v327, %v328
        %v332 = vshrl.u32 %v281, 16
        %v334 = vrot.slane %v332, 7
        %v335 = vshll.u32 %v281, 16
        %v337 = vor.u32 %v334, %v335
        %vm346 = vcmask 1040384
        %vm347 = vsmask.f32 256
        %vm348 = vmand %vm346, %vm347
        %v349 = vsel %vm348, 0, %v288
        %v350 = vsel %vm348, 0, %v295
        %v351 = vsel %vm348, 0, %v302
        %v352 = vsel %vm348, 0, %v309
        %v353 = vsel %vm348, 0, %v316
        %v354 = vsel %vm348, 0, %v323
        %v355 = vsel %vm348, 0, %v330
        %v356 = vsel %vm348, 0, %v337
        %v365 = vunpack.c.l.b16 %v250
        %v366 = vunpack.c.l.b16 %v251
        %v367 = vunpack.c.l.b16 %v252
        %v368 = vunpack.c.l.b16 %v253
        %v369 = vunpack.c.l.b16 %v254
        %v370 = vunpack.c.l.b16 %v255
        %v371 = vunpack.c.l.b16 %v256
        %v372 = vunpack.c.l.b16 %v257
        %v373 = vpack.c.b16 %v365, %v365
        %v374 = vpack.c.b16 %v366, %v366
        %v375 = vpack.c.b16 %v367, %v367
        %v376 = vpack.c.b16 %v368, %v368
        %v377 = vpack.c.b16 %v369, %v369
        %v378 = vpack.c.b16 %v370, %v370
        %v379 = vpack.c.b16 %v371, %v371
        %v380 = vpack.c.b16 %v372, %v372
        %v382 = vshrl.u32 %v373, 16
        %v384 = vrot.slane %v382, 7
        %v385 = vshll.u32 %v373, 16
        %v387 = vor.u32 %v384, %v385
        %v389 = vshrl.u32 %v374, 16
        %v391 = vrot.slane %v389, 7
        %v392 = vshll.u32 %v374, 16
        %v394 = vor.u32 %v391, %v392
        %v396 = vshrl.u32 %v375, 16
        %v398 = vrot.slane %v396, 7
        %v399 = vshll.u32 %v375, 16
        %v401 = vor.u32 %v398, %v399
        %v403 = vshrl.u32 %v376, 16
        %v405 = vrot.slane %v403, 7
        %v406 = vshll.u32 %v376, 16
        %v408 = vor.u32 %v405, %v406
        %v410 = vshrl.u32 %v377, 16
        %v412 = vrot.slane %v410, 7
        %v413 = vshll.u32 %v377, 16
        %v415 = vor.u32 %v412, %v413
        %v417 = vshrl.u32 %v378, 16
        %v419 = vrot.slane %v417, 7
        %v420 = vshll.u32 %v378, 16
        %v422 = vor.u32 %v419, %v420
        %v424 = vshrl.u32 %v379, 16
        %v426 = vrot.slane %v424, 7
        %v427 = vshll.u32 %v379, 16
        %v429 = vor.u32 %v426, %v427
        %v431 = vshrl.u32 %v380, 16
        %v433 = vrot.slane %v431, 7
        %v434 = vshll.u32 %v380, 16
        %v436 = vor.u32 %v433, %v434
        %v445 = vsel %vm348, 0, %v387
        %v446 = vsel %vm348, 0, %v394
        %v447 = vsel %vm348, 0, %v401
        %v448 = vsel %vm348, 0, %v408
        %v449 = vsel %vm348, 0, %v415
        %v450 = vsel %vm348, 0, %v422
        %v451 = vsel %vm348, 0, %v429
        %v452 = vsel %vm348, 0, %v436
        %v453 = vunpack.c.l.bf16 %v223
        %v454 = vunpack.c.l.bf16 %v224
        %v455 = vunpack.c.l.bf16 %v225
        %v456 = vunpack.c.l.bf16 %v226
        %v457 = vunpack.c.l.bf16 %v227
        %v458 = vunpack.c.l.bf16 %v228
        %v459 = vunpack.c.l.bf16 %v229
        %v460 = vunpack.c.l.bf16 %v230
        %v461 = vunpack.c.l.bf16 %v232
        %v462 = vunpack.c.l.bf16 %v233
        %v463 = vunpack.c.l.bf16 %v234
        %v464 = vunpack.c.l.bf16 %v235
        %v465 = vunpack.c.l.bf16 %v236
        %v466 = vunpack.c.l.bf16 %v237
        %v467 = vunpack.c.l.bf16 %v238
        %v468 = vunpack.c.l.bf16 %v239
        %v469 = vmax.f32 %v453, %v461
        %v470 = vmax.f32 %v454, %v462
        %v471 = vmax.f32 %v455, %v463
        %v472 = vmax.f32 %v456, %v464
        %v473 = vmax.f32 %v457, %v465
        %v474 = vmax.f32 %v458, %v466
        %v475 = vmax.f32 %v459, %v467
        %v476 = vmax.f32 %v460, %v468
        %v477 = vpack.c.bf16 %v469, %v469
        %v478 = vpack.c.bf16 %v470, %v470
        %v479 = vpack.c.bf16 %v471, %v471
        %v480 = vpack.c.bf16 %v472, %v472
        %v481 = vpack.c.bf16 %v473, %v473
        %v482 = vpack.c.bf16 %v474, %v474
        %v483 = vpack.c.bf16 %v475, %v475
        %v484 = vpack.c.bf16 %v476, %v476
        %v485 = vunpack.c.l.bf16 %v477
        %v486 = vunpack.c.l.bf16 %v478
        %v487 = vunpack.c.l.bf16 %v479
        %v488 = vunpack.c.l.bf16 %v480
        %v489 = vunpack.c.l.bf16 %v481
        %v490 = vunpack.c.l.bf16 %v482
        %v491 = vunpack.c.l.bf16 %v483
        %v492 = vunpack.c.l.bf16 %v484
        %v493 = vunpack.c.l.bf16 %v241
        %v494 = vunpack.c.l.bf16 %v242
        %v495 = vunpack.c.l.bf16 %v243
        %v496 = vunpack.c.l.bf16 %v244
        %v497 = vunpack.c.l.bf16 %v245
        %v498 = vunpack.c.l.bf16 %v246
        %v499 = vunpack.c.l.bf16 %v247
        %v500 = vunpack.c.l.bf16 %v248
        %v501 = vmax.f32 %v485, %v493
        %v502 = vmax.f32 %v486, %v494
        %v503 = vmax.f32 %v487, %v495
        %v504 = vmax.f32 %v488, %v496
        %v505 = vmax.f32 %v489, %v497
        %v506 = vmax.f32 %v490, %v498
        %v507 = vmax.f32 %v491, %v499
        %v508 = vmax.f32 %v492, %v500
        %v509 = vpack.c.bf16 %v501, %v501
        %v510 = vpack.c.bf16 %v502, %v502
        %v511 = vpack.c.bf16 %v503, %v503
        %v512 = vpack.c.bf16 %v504, %v504
        %v513 = vpack.c.bf16 %v505, %v505
        %v514 = vpack.c.bf16 %v506, %v506
        %v515 = vpack.c.bf16 %v507, %v507
        %v516 = vpack.c.bf16 %v508, %v508
        %v517 = vunpack.c.l.bf16 %v509
        %v518 = vunpack.c.l.bf16 %v510
        %v519 = vunpack.c.l.bf16 %v511
        %v520 = vunpack.c.l.bf16 %v512
        %v521 = vunpack.c.l.bf16 %v513
        %v522 = vunpack.c.l.bf16 %v514
        %v523 = vunpack.c.l.bf16 %v515
        %v524 = vunpack.c.l.bf16 %v516
        %v525 = vunpack.c.l.bf16 %v250
        %v526 = vunpack.c.l.bf16 %v251
        %v527 = vunpack.c.l.bf16 %v252
        %v528 = vunpack.c.l.bf16 %v253
        %v529 = vunpack.c.l.bf16 %v254
        %v530 = vunpack.c.l.bf16 %v255
        %v531 = vunpack.c.l.bf16 %v256
        %v532 = vunpack.c.l.bf16 %v257
        %v533 = vmax.f32 %v517, %v525
        %v534 = vmax.f32 %v518, %v526
        %v535 = vmax.f32 %v519, %v527
        %v536 = vmax.f32 %v520, %v528
        %v537 = vmax.f32 %v521, %v529
        %v538 = vmax.f32 %v522, %v530
        %v539 = vmax.f32 %v523, %v531
        %v540 = vmax.f32 %v524, %v532
        %v541 = vpack.c.bf16 %v533, %v533
        %v542 = vpack.c.bf16 %v534, %v534
        %v543 = vpack.c.bf16 %v535, %v535
        %v544 = vpack.c.bf16 %v536, %v536
        %v545 = vpack.c.bf16 %v537, %v537
        %v546 = vpack.c.bf16 %v538, %v538
        %v547 = vpack.c.bf16 %v539, %v539
        %v548 = vpack.c.bf16 %v540, %v540
        %v549 = vunpack.c.l.bf16 %v541
        %v550 = vunpack.c.l.bf16 %v542
        %v551 = vunpack.c.l.bf16 %v543
        %v552 = vunpack.c.l.bf16 %v544
        %v553 = vunpack.c.l.bf16 %v545
        %v554 = vunpack.c.l.bf16 %v546
        %v555 = vunpack.c.l.bf16 %v547
        %v556 = vunpack.c.l.bf16 %v548
        %v557 = vunpack.c.l.bf16 %v349
        %v558 = vunpack.c.l.bf16 %v350
        %v559 = vunpack.c.l.bf16 %v351
        %v560 = vunpack.c.l.bf16 %v352
        %v561 = vunpack.c.l.bf16 %v353
        %v562 = vunpack.c.l.bf16 %v354
        %v563 = vunpack.c.l.bf16 %v355
        %v564 = vunpack.c.l.bf16 %v356
        %v565 = vmax.f32 %v549, %v557
        %v566 = vmax.f32 %v550, %v558
        %v567 = vmax.f32 %v551, %v559
        %v568 = vmax.f32 %v552, %v560
        %v569 = vmax.f32 %v553, %v561
        %v570 = vmax.f32 %v554, %v562
        %v571 = vmax.f32 %v555, %v563
        %v572 = vmax.f32 %v556, %v564
        %v573 = vpack.c.bf16 %v565, %v565
        %v574 = vpack.c.bf16 %v566, %v566
        %v575 = vpack.c.bf16 %v567, %v567
        %v576 = vpack.c.bf16 %v568, %v568
        %v577 = vpack.c.bf16 %v569, %v569
        %v578 = vpack.c.bf16 %v570, %v570
        %v579 = vpack.c.bf16 %v571, %v571
        %v580 = vpack.c.bf16 %v572, %v572
        %v581 = vunpack.c.l.bf16 %v573
        %v582 = vunpack.c.l.bf16 %v574
        %v583 = vunpack.c.l.bf16 %v575
        %v584 = vunpack.c.l.bf16 %v576
        %v585 = vunpack.c.l.bf16 %v577
        %v586 = vunpack.c.l.bf16 %v578
        %v587 = vunpack.c.l.bf16 %v579
        %v588 = vunpack.c.l.bf16 %v580
        %v589 = vunpack.c.l.bf16 %v445
        %v590 = vunpack.c.l.bf16 %v446
        %v591 = vunpack.c.l.bf16 %v447
        %v592 = vunpack.c.l.bf16 %v448
        %v593 = vunpack.c.l.bf16 %v449
        %v594 = vunpack.c.l.bf16 %v450
        %v595 = vunpack.c.l.bf16 %v451
        %v596 = vunpack.c.l.bf16 %v452
        %v597 = vmax.f32 %v581, %v589
        %v598 = vmax.f32 %v582, %v590
        %v599 = vmax.f32 %v583, %v591
        %v600 = vmax.f32 %v584, %v592
        %v601 = vmax.f32 %v585, %v593
        %v602 = vmax.f32 %v586, %v594
        %v603 = vmax.f32 %v587, %v595
        %v604 = vmax.f32 %v588, %v596
        %v605 = vpack.c.bf16 %v597, %v597
        %v606 = vpack.c.bf16 %v598, %v598
        %v607 = vpack.c.bf16 %v599, %v599
        %v608 = vpack.c.bf16 %v600, %v600
        %v609 = vpack.c.bf16 %v601, %v601
        %v610 = vpack.c.bf16 %v602, %v602
        %v611 = vpack.c.bf16 %v603, %v603
        %v612 = vpack.c.bf16 %v604, %v604
        %v613 = vunpack.c.l.bf16 %v605
        %v614 = vunpack.c.l.bf16 %v606
        %v615 = vunpack.c.l.bf16 %v607
        %v616 = vunpack.c.l.bf16 %v608
        %v617 = vunpack.c.l.bf16 %v609
        %v618 = vunpack.c.l.bf16 %v610
        %v619 = vunpack.c.l.bf16 %v611
        %v620 = vunpack.c.l.bf16 %v612
        %v621 = vunpack.c.l.bf16 0
        %v622 = vmax.f32 %v613, %v621
        %v623 = vmax.f32 %v614, %v493
        %v624 = vmax.f32 %v615, %v494
        %v625 = vmax.f32 %v616, %v495
        %v626 = vmax.f32 %v617, %v496
        %v627 = vmax.f32 %v618, %v497
        %v628 = vmax.f32 %v619, %v498
        %v629 = vmax.f32 %v620, %v499
        %v630 = vpack.c.bf16 %v622, %v622
        %v631 = vpack.c.bf16 %v623, %v623
        %v632 = vpack.c.bf16 %v624, %v624
        %v633 = vpack.c.bf16 %v625, %v625
        %v634 = vpack.c.bf16 %v626, %v626
        %v635 = vpack.c.bf16 %v627, %v627
        %v636 = vpack.c.bf16 %v628, %v628
        %v637 = vpack.c.bf16 %v629, %v629
        %v638 = vunpack.c.l.bf16 %v630
        %v639 = vunpack.c.l.bf16 %v631
        %v640 = vunpack.c.l.bf16 %v632
        %v641 = vunpack.c.l.bf16 %v633
        %v642 = vunpack.c.l.bf16 %v634
        %v643 = vunpack.c.l.bf16 %v635
        %v644 = vunpack.c.l.bf16 %v636
        %v645 = vunpack.c.l.bf16 %v637
        %v646 = vmax.f32 %v638, %v621
        %v647 = vmax.f32 %v639, %v525
        %v648 = vmax.f32 %v640, %v526
        %v649 = vmax.f32 %v641, %v527
        %v650 = vmax.f32 %v642, %v528
        %v651 = vmax.f32 %v643, %v529
        %v652 = vmax.f32 %v644, %v530
        %v653 = vmax.f32 %v645, %v531
        %v654 = vpack.c.bf16 %v646, %v646
        %v655 = vpack.c.bf16 %v647, %v647
        %v656 = vpack.c.bf16 %v648, %v648
        %v657 = vpack.c.bf16 %v649, %v649
        %v658 = vpack.c.bf16 %v650, %v650
        %v659 = vpack.c.bf16 %v651, %v651
        %v660 = vpack.c.bf16 %v652, %v652
        %v661 = vpack.c.bf16 %v653, %v653
        %v662 = vunpack.c.l.bf16 %v654
        %v663 = vunpack.c.l.bf16 %v655
        %v664 = vunpack.c.l.bf16 %v656
        %v665 = vunpack.c.l.bf16 %v657
        %v666 = vunpack.c.l.bf16 %v658
        %v667 = vunpack.c.l.bf16 %v659
        %v668 = vunpack.c.l.bf16 %v660
        %v669 = vunpack.c.l.bf16 %v661
        %v670 = vmax.f32 %v662, %v621
        %v671 = vmax.f32 %v663, %v589
        %v672 = vmax.f32 %v664, %v590
        %v673 = vmax.f32 %v665, %v591
        %v674 = vmax.f32 %v666, %v592
        %v675 = vmax.f32 %v667, %v593
        %v676 = vmax.f32 %v668, %v594
        %v677 = vmax.f32 %v669, %v595
        %v678 = vpack.c.bf16 %v670, %v670
        %v679 = vpack.c.bf16 %v671, %v671
        %v680 = vpack.c.bf16 %v672, %v672
        %v681 = vpack.c.bf16 %v673, %v673
        %v682 = vpack.c.bf16 %v674, %v674
        %v683 = vpack.c.bf16 %v675, %v675
        %v684 = vpack.c.bf16 %v676, %v676
        %v685 = vpack.c.bf16 %v677, %v677
        %v687 = vshrl.u32 0, 16
        %v689 = vrot.slane %v687, 7
        %v690 = vshll.u32 0, 16
        %v692 = vor.u32 %v689, %v690
        %v694 = vshrl.u32 %v678, 16
        %v696 = vrot.slane %v694, 7
        %v697 = vshll.u32 %v678, 16
        %v699 = vor.u32 %v696, %v697
        %v701 = vshrl.u32 %v679, 16
        %v703 = vrot.slane %v701, 7
        %v704 = vshll.u32 %v679, 16
        %v706 = vor.u32 %v703, %v704
        %v708 = vshrl.u32 %v680, 16
        %v710 = vrot.slane %v708, 7
        %v711 = vshll.u32 %v680, 16
        %v713 = vor.u32 %v710, %v711
        %v715 = vshrl.u32 %v681, 16
        %v717 = vrot.slane %v715, 7
        %v718 = vshll.u32 %v681, 16
        %v720 = vor.u32 %v717, %v718
        %v722 = vshrl.u32 %v682, 16
        %v724 = vrot.slane %v722, 7
        %v725 = vshll.u32 %v682, 16
        %v727 = vor.u32 %v724, %v725
        %v729 = vshrl.u32 %v683, 16
        %v731 = vrot.slane %v729, 7
        %v732 = vshll.u32 %v683, 16
        %v734 = vor.u32 %v731, %v732
        %v736 = vshrl.u32 %v684, 16
        %v738 = vrot.slane %v736, 7
        %v739 = vshll.u32 %v684, 16
        %v741 = vor.u32 %v738, %v739
        %v743 = vshrl.u32 %v685, 16
        %v745 = vrot.slane %v743, 7
        %v746 = vshll.u32 %v685, 16
        %v748 = vor.u32 %v745, %v746
        %v758 = vsel %vm348, 0, %v692
        %v759 = vsel %vm348, 0, %v699
        %v760 = vsel %vm348, 0, %v706
        %v761 = vsel %vm348, 0, %v713
        %v762 = vsel %vm348, 0, %v720
        %v763 = vsel %vm348, 0, %v727
        %v764 = vsel %vm348, 0, %v734
        %v765 = vsel %vm348, 0, %v741
        %v766 = vsel %vm348, 0, %v748
        %vm767 = vcmask 1044480
        %vm768 = vsmask.f32 4352
        %vm769 = vmand %vm767, %vm768
        %v770 = vsel %vm769, %v758, 0
        %v771 = vsel %vm769, %v759, 0
        %v772 = vsel %vm769, %v760, 0
        %v773 = vsel %vm769, %v761, 0
        %v774 = vsel %vm769, %v762, 0
        %v775 = vsel %vm769, %v763, 0
        %v776 = vsel %vm769, %v764, 0
        %v777 = vsel %vm769, %v765, 0
        %v778 = vsel %vm769, %v766, 0
        %v779 = vld [vmem:[%s1] sm:$0xf]
        %v780 = vld [vmem:[%s1 + $0x4] sm:$0xf]
        %v781 = vld [vmem:[%s1 + $0x8] sm:$0xf]
        %v782 = vld [vmem:[%s1 + $0xc] sm:$0xf]
        %v783 = vld [vmem:[%s1 + $0x10] sm:$0xf]
        %v784 = vld [vmem:[%s1 + $0x14] sm:$0xf]
        %v785 = vld [vmem:[%s1 + $0x18] sm:$0xf]
        %v786 = vld [vmem:[%s1 + $0x1c] sm:$0xf]
        %v787 = vld [vmem:[%s1 + $0x20] sm:$0xf]
        %v788 = vld [vmem:[%s1 + $0x24] sm:$0xf]
        %v789 = vld [vmem:[%s1 + $0x28] sm:$0xf]
        %v790 = vld [vmem:[%s1 + $0x2c] sm:$0xf]
        %v791 = vld [vmem:[%s1 + $0x30] sm:$0xf]
        %v792 = vld [vmem:[%s1 + $0x34] sm:$0xf]
        %v793 = vld [vmem:[%s1 + $0x38] sm:$0xf]
        %v794 = vld [vmem:[%s1 + $0x3c] sm:$0xf]
        %v803 = vunpack.c.l.b16 %v770
        %v804 = vunpack.c.h.b16 %v770
        %v805 = vunpack.c.l.b16 %v771
        %v806 = vunpack.c.h.b16 %v771
        %v807 = vunpack.c.l.b16 %v772
        %v808 = vunpack.c.h.b16 %v772
        %v809 = vunpack.c.l.b16 %v773
        %v810 = vunpack.c.h.b16 %v773
        %v811 = vunpack.c.l.b16 %v774
        %v812 = vunpack.c.h.b16 %v774
        %v813 = vunpack.c.l.b16 %v775
        %v814 = vunpack.c.h.b16 %v775
        %v815 = vunpack.c.l.b16 %v776
        %v816 = vunpack.c.h.b16 %v776
        %v817 = vunpack.c.l.b16 %v777
        %v818 = vunpack.c.h.b16 %v777
        %v819 = vpack.c.b16 %v803, %v803
        %v820 = vpack.c.b16 %v804, %v804
        %v821 = vpack.c.b16 %v805, %v805
        %v822 = vpack.c.b16 %v806, %v806
        %v823 = vpack.c.b16 %v807, %v807
        %v824 = vpack.c.b16 %v808, %v808
        %v825 = vpack.c.b16 %v809, %v809
        %v826 = vpack.c.b16 %v810, %v810
        %v827 = vpack.c.b16 %v811, %v811
        %v828 = vpack.c.b16 %v812, %v812
        %v829 = vpack.c.b16 %v813, %v813
        %v830 = vpack.c.b16 %v814, %v814
        %v831 = vpack.c.b16 %v815, %v815
        %v832 = vpack.c.b16 %v816, %v816
        %v833 = vpack.c.b16 %v817, %v817
        %v834 = vpack.c.b16 %v818, %v818
        %vm835 = vsmask.f32 3328
        %vm836 = vsmask.f32 7440
        %vm837 = vmor %vm835, %vm836
        %v839 = vshrl.u32 %v819, 16
        %v841 = vrot.slane %v839, 4
        %v842 = vshll.u32 %v819, 16
        %v844 = vrot.slane %v842, 5
        %v845 = vor.u32 %v841, %v844
        %v846 = vrot.slane %v845, 4
        %v848 = vshll.u32 %v820, 16
        %v850 = vrot.slane %v848, 5
        %v851 = vsel %vm837, %v846, %v850
        %v853 = vshrl.u32 %v821, 16
        %v855 = vrot.slane %v853, 4
        %v856 = vshll.u32 %v821, 16
        %v858 = vrot.slane %v856, 5
        %v859 = vor.u32 %v855, %v858
        %v860 = vrot.slane %v859, 4
        %v862 = vshll.u32 %v822, 16
        %v864 = vrot.slane %v862, 5
        %v865 = vsel %vm837, %v860, %v864
        %v867 = vshrl.u32 %v823, 16
        %v869 = vrot.slane %v867, 4
        %v870 = vshll.u32 %v823, 16
        %v872 = vrot.slane %v870, 5
        %v873 = vor.u32 %v869, %v872
        %v874 = vrot.slane %v873, 4
        %v876 = vshll.u32 %v824, 16
        %v878 = vrot.slane %v876, 5
        %v879 = vsel %vm837, %v874, %v878
        %v881 = vshrl.u32 %v825, 16
        %v883 = vrot.slane %v881, 4
        %v884 = vshll.u32 %v825, 16
        %v886 = vrot.slane %v884, 5
        %v887 = vor.u32 %v883, %v886
        %v888 = vrot.slane %v887, 4
        %v890 = vshll.u32 %v826, 16
        %v892 = vrot.slane %v890, 5
        %v893 = vsel %vm837, %v888, %v892
        %v895 = vshrl.u32 %v827, 16
        %v897 = vrot.slane %v895, 4
        %v898 = vshll.u32 %v827, 16
        %v900 = vrot.slane %v898, 5
        %v901 = vor.u32 %v897, %v900
        %v902 = vrot.slane %v901, 4
        %v904 = vshll.u32 %v828, 16
        %v906 = vrot.slane %v904, 5
        %v907 = vsel %vm837, %v902, %v906
        %v909 = vshrl.u32 %v829, 16
        %v911 = vrot.slane %v909, 4
        %v912 = vshll.u32 %v829, 16
        %v914 = vrot.slane %v912, 5
        %v915 = vor.u32 %v911, %v914
        %v916 = vrot.slane %v915, 4
        %v918 = vshll.u32 %v830, 16
        %v920 = vrot.slane %v918, 5
        %v921 = vsel %vm837, %v916, %v920
        %v923 = vshrl.u32 %v831, 16
        %v925 = vrot.slane %v923, 4
        %v926 = vshll.u32 %v831, 16
        %v928 = vrot.slane %v926, 5
        %v929 = vor.u32 %v925, %v928
        %v930 = vrot.slane %v929, 4
        %v932 = vshll.u32 %v832, 16
        %v934 = vrot.slane %v932, 5
        %v935 = vsel %vm837, %v930, %v934
        %v937 = vshrl.u32 %v833, 16
        %v939 = vrot.slane %v937, 4
        %v940 = vshll.u32 %v833, 16
        %v942 = vrot.slane %v940, 5
        %v943 = vor.u32 %v939, %v942
        %v944 = vrot.slane %v943, 4
        %v946 = vshll.u32 %v834, 16
        %v948 = vrot.slane %v946, 5
        %v949 = vsel %vm837, %v944, %v948
        %s950 = scalar_lea.vmem %s1, 64
        %v951 = vld [vmem:[%s950] sm:$0xf]
        %v952 = vld [vmem:[%s950 + $0x4] sm:$0xf]
        %v953 = vld [vmem:[%s950 + $0x8] sm:$0xf]
        %v954 = vld [vmem:[%s950 + $0xc] sm:$0xf]
        %v955 = vld [vmem:[%s950 + $0x10] sm:$0xf]
        %v956 = vld [vmem:[%s950 + $0x14] sm:$0xf]
        %v957 = vld [vmem:[%s950 + $0x18] sm:$0xf]
        %v958 = vld [vmem:[%s950 + $0x1c] sm:$0xf]
        %v959 = vld [vmem:[%s950 + $0x20] sm:$0xf]
        %v960 = vld [vmem:[%s950 + $0x24] sm:$0xf]
        %v961 = vld [vmem:[%s950 + $0x28] sm:$0xf]
        %v962 = vld [vmem:[%s950 + $0x2c] sm:$0xf]
        %v963 = vld [vmem:[%s950 + $0x30] sm:$0xf]
        %v964 = vld [vmem:[%s950 + $0x34] sm:$0xf]
        %v965 = vld [vmem:[%s950 + $0x38] sm:$0xf]
        %v966 = vld [vmem:[%s950 + $0x3c] sm:$0xf]
        %v967 = vunpack.c.l.b16 %v851
        %v968 = vunpack.c.l.b16 %v865
        %v969 = vunpack.c.l.b16 %v879
        %v970 = vunpack.c.l.b16 %v893
        %v971 = vunpack.c.l.b16 %v907
        %v972 = vunpack.c.l.b16 %v921
        %v973 = vunpack.c.l.b16 %v935
        %v974 = vunpack.c.l.b16 %v949
        %v975 = vpack.c.b16 %v968, %v967
        %v976 = vpack.c.b16 %v970, %v969
        %v977 = vpack.c.b16 %v972, %v971
        %v978 = vpack.c.b16 %v974, %v973
        %v999 = vunpack.c.l.b16 %v951
        %v1000 = vunpack.c.l.b16 %v952
        %v1001 = vunpack.c.l.b16 %v953
        %v1002 = vunpack.c.l.b16 %v954
        %v1003 = vunpack.c.l.b16 %v955
        %v1004 = vunpack.c.l.b16 %v956
        %v1005 = vunpack.c.l.b16 %v957
        %v1006 = vunpack.c.l.b16 %v958
        %v1007 = vunpack.c.l.b16 %v959
        %v1008 = vunpack.c.l.b16 %v960
        %v1009 = vunpack.c.l.b16 %v961
        %v1010 = vunpack.c.l.b16 %v962
        %v1011 = vunpack.c.l.b16 %v963
        %v1012 = vunpack.c.l.b16 %v964
        %v1013 = vunpack.c.l.b16 %v965
        %v1014 = vunpack.c.l.b16 %v966
        %v1015 = vpack.c.b16 %v1000, %v999
        %v1016 = vpack.c.b16 %v1002, %v1001
        %v1017 = vpack.c.b16 %v1004, %v1003
        %v1018 = vpack.c.b16 %v1006, %v1005
        %v1019 = vpack.c.b16 %v1008, %v1007
        %v1020 = vpack.c.b16 %v1010, %v1009
        %v1021 = vpack.c.b16 %v1012, %v1011
        %v1022 = vpack.c.b16 %v1014, %v1013
        %1031 = vmatpush.bf16.msra.mxu0 %v1022
        %1032 = vmatpush.bf16.msra.mxu0 %v1021
        %1033 = vmatpush.bf16.msra.mxu0 %v1020
        %1034 = vmatpush.bf16.msra.mxu0 %v1019
        %1035 = vmatpush.bf16.msra.mxu0 %v1018
        %1036 = vmatpush.bf16.msra.mxu0 %v1017
        %1037 = vmatpush.bf16.msra.mxu0 %v1016
        %1038 = vmatpush.bf16.msra.mxu0 %v1015
        %1039 = vmatmul.bf16.gmra.mxu0 %v975
        %v1040 = vpop.f32.mrf.mxu0
        %v1041 = vadd.f32 0.0, %v1040
        %v1042 = vpop.f32.mrf.mxu0
        %v1043 = vadd.f32 0.0, %v1042
        %1044 = vmatmul.bf16.gmra.mxu0 %v976
        %v1045 = vpop.f32.mrf.mxu0
        %v1046 = vadd.f32 0.0, %v1045
        %v1047 = vpop.f32.mrf.mxu0
        %v1048 = vadd.f32 0.0, %v1047
        %1049 = vmatmul.bf16.gmra.mxu0 %v977
        %v1050 = vpop.f32.mrf.mxu0
        %v1051 = vadd.f32 0.0, %v1050
        %v1052 = vpop.f32.mrf.mxu0
        %v1053 = vadd.f32 0.0, %v1052
        %1054 = vmatmul.bf16.gmra.mxu0 %v978
        %v1055 = vpop.f32.mrf.mxu0
        %v1056 = vadd.f32 0.0, %v1055
        %v1057 = vpop.f32.mrf.mxu0
        %v1058 = vadd.f32 0.0, %v1057
        %1059 = vdwg.mxu0
        %v1060 = vpack.c.b16 %v805, %v803
        %v1061 = vpack.c.b16 %v809, %v807
        %v1062 = vpack.c.b16 %v813, %v811
        %v1063 = vpack.c.b16 %v817, %v815
        %v1084 = vunpack.c.l.b16 %v779
        %v1085 = vunpack.c.l.b16 %v780
        %v1086 = vunpack.c.l.b16 %v781
        %v1087 = vunpack.c.l.b16 %v782
        %v1088 = vunpack.c.l.b16 %v783
        %v1089 = vunpack.c.l.b16 %v784
        %v1090 = vunpack.c.l.b16 %v785
        %v1091 = vunpack.c.l.b16 %v786
        %v1092 = vunpack.c.l.b16 %v787
        %v1093 = vunpack.c.l.b16 %v788
        %v1094 = vunpack.c.l.b16 %v789
        %v1095 = vunpack.c.l.b16 %v790
        %v1096 = vunpack.c.l.b16 %v791
        %v1097 = vunpack.c.l.b16 %v792
        %v1098 = vunpack.c.l.b16 %v793
        %v1099 = vunpack.c.l.b16 %v794
        %v1100 = vpack.c.b16 %v1085, %v1084
        %v1101 = vpack.c.b16 %v1087, %v1086
        %v1102 = vpack.c.b16 %v1089, %v1088
        %v1103 = vpack.c.b16 %v1091, %v1090
        %v1104 = vpack.c.b16 %v1093, %v1092
        %v1105 = vpack.c.b16 %v1095, %v1094
        %v1106 = vpack.c.b16 %v1097, %v1096
        %v1107 = vpack.c.b16 %v1099, %v1098
        %1116 = vmatpush.bf16.msra.mxu0 %v1107
        %1117 = vmatpush.bf16.msra.mxu0 %v1106
        %1118 = vmatpush.bf16.msra.mxu0 %v1105
        %1119 = vmatpush.bf16.msra.mxu0 %v1104
        %1120 = vmatpush.bf16.msra.mxu0 %v1103
        %1121 = vmatpush.bf16.msra.mxu0 %v1102
        %1122 = vmatpush.bf16.msra.mxu0 %v1101
        %1123 = vmatpush.bf16.msra.mxu0 %v1100
        %1124 = vmatmul.bf16.gmra.mxu0 %v1060
        %v1125 = vpop.f32.mrf.mxu0
        %v1126 = vadd.f32 %v1041, %v1125
        %v1127 = vpop.f32.mrf.mxu0
        %v1128 = vadd.f32 %v1043, %v1127
        %1129 = vmatmul.bf16.gmra.mxu0 %v1061
        %v1130 = vpop.f32.mrf.mxu0
        %v1131 = vadd.f32 %v1046, %v1130
        %v1132 = vpop.f32.mrf.mxu0
        %v1133 = vadd.f32 %v1048, %v1132
        %1134 = vmatmul.bf16.gmra.mxu0 %v1062
        %v1135 = vpop.f32.mrf.mxu0
        %v1136 = vadd.f32 %v1051, %v1135
        %v1137 = vpop.f32.mrf.mxu0
        %v1138 = vadd.f32 %v1053, %v1137
        %1139 = vmatmul.bf16.gmra.mxu0 %v1063
        %v1140 = vpop.f32.mrf.mxu0
        %v1141 = vadd.f32 %v1056, %v1140
        %v1142 = vpop.f32.mrf.mxu0
        %v1143 = vadd.f32 %v1058, %v1142
        %1144 = vdwg.mxu0
        %vm1145 = vcmask 1042432
        %vm1146 = vcmask 1046532
        %vm1147 = vmor %vm1145, %vm1146
        %v1148 = vrot.slane %v819, 5
        %v1149 = vrot.slane %v1148, 4
        %v1150 = vrot.slane %v820, 5
        %v1151 = vsel %vm1147, %v1149, %v1150
        %v1152 = vrot.slane %v821, 5
        %v1153 = vrot.slane %v1152, 4
        %v1154 = vrot.slane %v822, 5
        %v1155 = vsel %vm1147, %v1153, %v1154
        %v1156 = vrot.slane %v823, 5
        %v1157 = vrot.slane %v1156, 4
        %v1158 = vrot.slane %v824, 5
        %v1159 = vsel %vm1147, %v1157, %v1158
        %v1160 = vrot.slane %v825, 5
        %v1161 = vrot.slane %v1160, 4
        %v1162 = vrot.slane %v826, 5
        %v1163 = vsel %vm1147, %v1161, %v1162
        %v1164 = vrot.slane %v827, 5
        %v1165 = vrot.slane %v1164, 4
        %v1166 = vrot.slane %v828, 5
        %v1167 = vsel %vm1147, %v1165, %v1166
        %v1168 = vrot.slane %v829, 5
        %v1169 = vrot.slane %v1168, 4
        %v1170 = vrot.slane %v830, 5
        %v1171 = vsel %vm1147, %v1169, %v1170
        %v1172 = vrot.slane %v831, 5
        %v1173 = vrot.slane %v1172, 4
        %v1174 = vrot.slane %v832, 5
        %v1175 = vsel %vm1147, %v1173, %v1174
        %v1176 = vrot.slane %v833, 5
        %v1177 = vrot.slane %v1176, 4
        %v1178 = vrot.slane %v834, 5
        %v1179 = vsel %vm1147, %v1177, %v1178
        %s1180 = scalar_lea.vmem %s1, 128
        %v1181 = vld [vmem:[%s1180] sm:$0xf]
        %v1182 = vld [vmem:[%s1180 + $0x4] sm:$0xf]
        %v1183 = vld [vmem:[%s1180 + $0x8] sm:$0xf]
        %v1184 = vld [vmem:[%s1180 + $0xc] sm:$0xf]
        %v1185 = vld [vmem:[%s1180 + $0x10] sm:$0xf]
        %v1186 = vld [vmem:[%s1180 + $0x14] sm:$0xf]
        %v1187 = vld [vmem:[%s1180 + $0x18] sm:$0xf]
        %v1188 = vld [vmem:[%s1180 + $0x1c] sm:$0xf]
        %v1189 = vld [vmem:[%s1180 + $0x20] sm:$0xf]
        %v1190 = vld [vmem:[%s1180 + $0x24] sm:$0xf]
        %v1191 = vld [vmem:[%s1180 + $0x28] sm:$0xf]
        %v1192 = vld [vmem:[%s1180 + $0x2c] sm:$0xf]
        %v1193 = vld [vmem:[%s1180 + $0x30] sm:$0xf]
        %v1194 = vld [vmem:[%s1180 + $0x34] sm:$0xf]
        %v1195 = vld [vmem:[%s1180 + $0x38] sm:$0xf]
        %v1196 = vld [vmem:[%s1180 + $0x3c] sm:$0xf]
        %v1197 = vunpack.c.l.b16 %v1151
        %v1198 = vunpack.c.l.b16 %v1155
        %v1199 = vunpack.c.l.b16 %v1159
        %v1200 = vunpack.c.l.b16 %v1163
        %v1201 = vunpack.c.l.b16 %v1167
        %v1202 = vunpack.c.l.b16 %v1171
        %v1203 = vunpack.c.l.b16 %v1175
        %v1204 = vunpack.c.l.b16 %v1179
        %v1205 = vpack.c.b16 %v1198, %v1197
        %v1206 = vpack.c.b16 %v1200, %v1199
        %v1207 = vpack.c.b16 %v1202, %v1201
        %v1208 = vpack.c.b16 %v1204, %v1203
        %v1229 = vunpack.c.l.b16 %v1181
        %v1230 = vunpack.c.l.b16 %v1182
        %v1231 = vunpack.c.l.b16 %v1183
        %v1232 = vunpack.c.l.b16 %v1184
        %v1233 = vunpack.c.l.b16 %v1185
        %v1234 = vunpack.c.l.b16 %v1186
        %v1235 = vunpack.c.l.b16 %v1187
        %v1236 = vunpack.c.l.b16 %v1188
        %v1237 = vunpack.c.l.b16 %v1189
        %v1238 = vunpack.c.l.b16 %v1190
        %v1239 = vunpack.c.l.b16 %v1191
        %v1240 = vunpack.c.l.b16 %v1192
        %v1241 = vunpack.c.l.b16 %v1193
        %v1242 = vunpack.c.l.b16 %v1194
        %v1243 = vunpack.c.l.b16 %v1195
        %v1244 = vunpack.c.l.b16 %v1196
        %v1245 = vpack.c.b16 %v1230, %v1229
        %v1246 = vpack.c.b16 %v1232, %v1231
        %v1247 = vpack.c.b16 %v1234, %v1233
        %v1248 = vpack.c.b16 %v1236, %v1235
        %v1249 = vpack.c.b16 %v1238, %v1237
        %v1250 = vpack.c.b16 %v1240, %v1239
        %v1251 = vpack.c.b16 %v1242, %v1241
        %v1252 = vpack.c.b16 %v1244, %v1243
        %1261 = vmatpush.bf16.msra.mxu0 %v1252
        %1262 = vmatpush.bf16.msra.mxu0 %v1251
        %1263 = vmatpush.bf16.msra.mxu0 %v1250
        %1264 = vmatpush.bf16.msra.mxu0 %v1249
        %1265 = vmatpush.bf16.msra.mxu0 %v1248
        %1266 = vmatpush.bf16.msra.mxu0 %v1247
        %1267 = vmatpush.bf16.msra.mxu0 %v1246
        %1268 = vmatpush.bf16.msra.mxu0 %v1245
        %1269 = vmatmul.bf16.gmra.mxu0 %v1205
        %v1270 = vpop.f32.mrf.mxu0
        %v1271 = vadd.f32 0.0, %v1270
        %v1272 = vpop.f32.mrf.mxu0
        %v1273 = vadd.f32 0.0, %v1272
        %1274 = vmatmul.bf16.gmra.mxu0 %v1206
        %v1275 = vpop.f32.mrf.mxu0
        %v1276 = vadd.f32 0.0, %v1275
        %v1277 = vpop.f32.mrf.mxu0
        %v1278 = vadd.f32 0.0, %v1277
        %1279 = vmatmul.bf16.gmra.mxu0 %v1207
        %v1280 = vpop.f32.mrf.mxu0
        %v1281 = vadd.f32 0.0, %v1280
        %v1282 = vpop.f32.mrf.mxu0
        %v1283 = vadd.f32 0.0, %v1282
        %1284 = vmatmul.bf16.gmra.mxu0 %v1208
        %v1285 = vpop.f32.mrf.mxu0
        %v1286 = vadd.f32 0.0, %v1285
        %v1287 = vpop.f32.mrf.mxu0
        %v1288 = vadd.f32 0.0, %v1287
        %1289 = vdwg.mxu0
        %v1290 = vadd.f32 %v1126, %v1271
        %v1291 = vadd.f32 %v1128, %v1273
        %v1292 = vadd.f32 %v1131, %v1276
        %v1293 = vadd.f32 %v1133, %v1278
        %v1294 = vadd.f32 %v1136, %v1281
        %v1295 = vadd.f32 %v1138, %v1283
        %v1296 = vadd.f32 %v1141, %v1286
        %v1297 = vadd.f32 %v1143, %v1288
        %s1298 = scalar_lea.vmem %s1, 192
        %v1299 = vld [vmem:[%s1298] sm:$0xf]
        %v1300 = vld [vmem:[%s1298 + $0x4] sm:$0xf]
        %v1301 = vld [vmem:[%s1298 + $0x8] sm:$0xf]
        %v1302 = vld [vmem:[%s1298 + $0xc] sm:$0xf]
        %v1303 = vld [vmem:[%s1298 + $0x10] sm:$0xf]
        %v1304 = vld [vmem:[%s1298 + $0x14] sm:$0xf]
        %v1305 = vld [vmem:[%s1298 + $0x18] sm:$0xf]
        %v1306 = vld [vmem:[%s1298 + $0x1c] sm:$0xf]
        %v1307 = vld [vmem:[%s1298 + $0x20] sm:$0xf]
        %v1308 = vld [vmem:[%s1298 + $0x24] sm:$0xf]
        %v1309 = vld [vmem:[%s1298 + $0x28] sm:$0xf]
        %v1310 = vld [vmem:[%s1298 + $0x2c] sm:$0xf]
        %v1311 = vld [vmem:[%s1298 + $0x30] sm:$0xf]
        %v1312 = vld [vmem:[%s1298 + $0x34] sm:$0xf]
        %v1313 = vld [vmem:[%s1298 + $0x38] sm:$0xf]
        %v1314 = vld [vmem:[%s1298 + $0x3c] sm:$0xf]
        %v1316 = vunpack.c.l.b16 %v778
        %v1317 = vpack.c.b16 %v807, %v805
        %v1318 = vpack.c.b16 %v811, %v809
        %v1319 = vpack.c.b16 %v815, %v813
        %v1320 = vpack.c.b16 %v1316, %v817
        %v1341 = vunpack.c.l.b16 %v1299
        %v1342 = vunpack.c.l.b16 %v1300
        %v1343 = vunpack.c.l.b16 %v1301
        %v1344 = vunpack.c.l.b16 %v1302
        %v1345 = vunpack.c.l.b16 %v1303
        %v1346 = vunpack.c.l.b16 %v1304
        %v1347 = vunpack.c.l.b16 %v1305
        %v1348 = vunpack.c.l.b16 %v1306
        %v1349 = vunpack.c.l.b16 %v1307
        %v1350 = vunpack.c.l.b16 %v1308
        %v1351 = vunpack.c.l.b16 %v1309
        %v1352 = vunpack.c.l.b16 %v1310
        %v1353 = vunpack.c.l.b16 %v1311
        %v1354 = vunpack.c.l.b16 %v1312
        %v1355 = vunpack.c.l.b16 %v1313
        %v1356 = vunpack.c.l.b16 %v1314
        %v1357 = vpack.c.b16 %v1342, %v1341
        %v1358 = vpack.c.b16 %v1344, %v1343
        %v1359 = vpack.c.b16 %v1346, %v1345
        %v1360 = vpack.c.b16 %v1348, %v1347
        %v1361 = vpack.c.b16 %v1350, %v1349
        %v1362 = vpack.c.b16 %v1352, %v1351
        %v1363 = vpack.c.b16 %v1354, %v1353
        %v1364 = vpack.c.b16 %v1356, %v1355
        %1373 = vmatpush.bf16.msra.mxu0 %v1364
        %1374 = vmatpush.bf16.msra.mxu0 %v1363
        %1375 = vmatpush.bf16.msra.mxu0 %v1362
        %1376 = vmatpush.bf16.msra.mxu0 %v1361
        %1377 = vmatpush.bf16.msra.mxu0 %v1360
        %1378 = vmatpush.bf16.msra.mxu0 %v1359
        %1379 = vmatpush.bf16.msra.mxu0 %v1358
        %1380 = vmatpush.bf16.msra.mxu0 %v1357
        %1381 = vmatmul.bf16.gmra.mxu0 %v1317
        %v1382 = vpop.f32.mrf.mxu0
        %v1383 = vadd.f32 0.0, %v1382
        %v1384 = vpop.f32.mrf.mxu0
        %v1385 = vadd.f32 0.0, %v1384
        %1386 = vmatmul.bf16.gmra.mxu0 %v1318
        %v1387 = vpop.f32.mrf.mxu0
        %v1388 = vadd.f32 0.0, %v1387
        %v1389 = vpop.f32.mrf.mxu0
        %v1390 = vadd.f32 0.0, %v1389
        %1391 = vmatmul.bf16.gmra.mxu0 %v1319
        %v1392 = vpop.f32.mrf.mxu0
        %v1393 = vadd.f32 0.0, %v1392
        %v1394 = vpop.f32.mrf.mxu0
        %v1395 = vadd.f32 0.0, %v1394
        %1396 = vmatmul.bf16.gmra.mxu0 %v1320
        %v1397 = vpop.f32.mrf.mxu0
        %v1398 = vadd.f32 0.0, %v1397
        %v1399 = vpop.f32.mrf.mxu0
        %v1400 = vadd.f32 0.0, %v1399
        %1401 = vdwg.mxu0
        %v1402 = vadd.f32 %v1290, %v1383
        %v1403 = vadd.f32 %v1291, %v1385
        %v1404 = vadd.f32 %v1292, %v1388
        %v1405 = vadd.f32 %v1293, %v1390
        %v1406 = vadd.f32 %v1294, %v1393
        %v1407 = vadd.f32 %v1295, %v1395
        %v1408 = vadd.f32 %v1296, %v1398
        %v1409 = vadd.f32 %v1297, %v1400
        %v1410 = vunpack.c.h.b16 %v778
        %v1411 = vpack.c.b16 %v1316, %v1316
        %v1412 = vpack.c.b16 %v1410, %v1410
        %v1414 = vshrl.u32 %v1411, 16
        %v1416 = vrot.slane %v1414, 4
        %v1417 = vshll.u32 %v1411, 16
        %v1419 = vrot.slane %v1417, 5
        %v1420 = vor.u32 %v1416, %v1419
        %v1421 = vrot.slane %v1420, 4
        %v1423 = vshll.u32 %v1412, 16
        %v1425 = vrot.slane %v1423, 5
        %v1426 = vsel %vm837, %v1421, %v1425
        %s1427 = scalar_lea.vmem %s1, 256
        %v1428 = vld [vmem:[%s1427] sm:$0xf]
        %v1429 = vld [vmem:[%s1427 + $0x4] sm:$0xf]
        %v1430 = vld [vmem:[%s1427 + $0x8] sm:$0xf]
        %v1431 = vld [vmem:[%s1427 + $0xc] sm:$0xf]
        %v1432 = vld [vmem:[%s1427 + $0x10] sm:$0xf]
        %v1433 = vld [vmem:[%s1427 + $0x14] sm:$0xf]
        %v1434 = vld [vmem:[%s1427 + $0x18] sm:$0xf]
        %v1435 = vld [vmem:[%s1427 + $0x1c] sm:$0xf]
        %v1436 = vld [vmem:[%s1427 + $0x20] sm:$0xf]
        %v1437 = vld [vmem:[%s1427 + $0x24] sm:$0xf]
        %v1438 = vld [vmem:[%s1427 + $0x28] sm:$0xf]
        %v1439 = vld [vmem:[%s1427 + $0x2c] sm:$0xf]
        %v1440 = vld [vmem:[%s1427 + $0x30] sm:$0xf]
        %v1441 = vld [vmem:[%s1427 + $0x34] sm:$0xf]
        %v1442 = vld [vmem:[%s1427 + $0x38] sm:$0xf]
        %v1443 = vld [vmem:[%s1427 + $0x3c] sm:$0xf]
        %v1444 = vunpack.c.l.b16 %v1426
        %v1445 = vpack.c.b16 %v969, %v968
        %v1446 = vpack.c.b16 %v971, %v970
        %v1447 = vpack.c.b16 %v973, %v972
        %v1448 = vpack.c.b16 %v1444, %v974
        %v1469 = vunpack.c.l.b16 %v1428
        %v1470 = vunpack.c.l.b16 %v1429
        %v1471 = vunpack.c.l.b16 %v1430
        %v1472 = vunpack.c.l.b16 %v1431
        %v1473 = vunpack.c.l.b16 %v1432
        %v1474 = vunpack.c.l.b16 %v1433
        %v1475 = vunpack.c.l.b16 %v1434
        %v1476 = vunpack.c.l.b16 %v1435
        %v1477 = vunpack.c.l.b16 %v1436
        %v1478 = vunpack.c.l.b16 %v1437
        %v1479 = vunpack.c.l.b16 %v1438
        %v1480 = vunpack.c.l.b16 %v1439
        %v1481 = vunpack.c.l.b16 %v1440
        %v1482 = vunpack.c.l.b16 %v1441
        %v1483 = vunpack.c.l.b16 %v1442
        %v1484 = vunpack.c.l.b16 %v1443
        %v1485 = vpack.c.b16 %v1470, %v1469
        %v1486 = vpack.c.b16 %v1472, %v1471
        %v1487 = vpack.c.b16 %v1474, %v1473
        %v1488 = vpack.c.b16 %v1476, %v1475
        %v1489 = vpack.c.b16 %v1478, %v1477
        %v1490 = vpack.c.b16 %v1480, %v1479
        %v1491 = vpack.c.b16 %v1482, %v1481
        %v1492 = vpack.c.b16 %v1484, %v1483
        %1501 = vmatpush.bf16.msra.mxu0 %v1492
        %1502 = vmatpush.bf16.msra.mxu0 %v1491
        %1503 = vmatpush.bf16.msra.mxu0 %v1490
        %1504 = vmatpush.bf16.msra.mxu0 %v1489
        %1505 = vmatpush.bf16.msra.mxu0 %v1488
        %1506 = vmatpush.bf16.msra.mxu0 %v1487
        %1507 = vmatpush.bf16.msra.mxu0 %v1486
        %1508 = vmatpush.bf16.msra.mxu0 %v1485
        %1509 = vmatmul.bf16.gmra.mxu0 %v1445
        %v1510 = vpop.f32.mrf.mxu0
        %v1511 = vadd.f32 0.0, %v1510
        %v1512 = vpop.f32.mrf.mxu0
        %v1513 = vadd.f32 0.0, %v1512
        %1514 = vmatmul.bf16.gmra.mxu0 %v1446
        %v1515 = vpop.f32.mrf.mxu0
        %v1516 = vadd.f32 0.0, %v1515
        %v1517 = vpop.f32.mrf.mxu0
        %v1518 = vadd.f32 0.0, %v1517
        %1519 = vmatmul.bf16.gmra.mxu0 %v1447
        %v1520 = vpop.f32.mrf.mxu0
        %v1521 = vadd.f32 0.0, %v1520
        %v1522 = vpop.f32.mrf.mxu0
        %v1523 = vadd.f32 0.0, %v1522
        %1524 = vmatmul.bf16.gmra.mxu0 %v1448
        %v1525 = vpop.f32.mrf.mxu0
        %v1526 = vadd.f32 0.0, %v1525
        %v1527 = vpop.f32.mrf.mxu0
        %v1528 = vadd.f32 0.0, %v1527
        %1529 = vdwg.mxu0
        %v1530 = vadd.f32 %v1402, %v1511
        %v1531 = vadd.f32 %v1403, %v1513
        %v1532 = vadd.f32 %v1404, %v1516
        %v1533 = vadd.f32 %v1405, %v1518
        %v1534 = vadd.f32 %v1406, %v1521
        %v1535 = vadd.f32 %v1407, %v1523
        %v1536 = vadd.f32 %v1408, %v1526
        %v1537 = vadd.f32 %v1409, %v1528
        %v1538 = vrot.slane %v1411, 5
        %v1539 = vrot.slane %v1538, 4
        %v1540 = vrot.slane %v1412, 5
        %v1541 = vsel %vm1147, %v1539, %v1540
        %s1542 = scalar_lea.vmem %s1, 320
        %v1543 = vld [vmem:[%s1542] sm:$0xf]
        %v1544 = vld [vmem:[%s1542 + $0x4] sm:$0xf]
        %v1545 = vld [vmem:[%s1542 + $0x8] sm:$0xf]
        %v1546 = vld [vmem:[%s1542 + $0xc] sm:$0xf]
        %v1547 = vld [vmem:[%s1542 + $0x10] sm:$0xf]
        %v1548 = vld [vmem:[%s1542 + $0x14] sm:$0xf]
        %v1549 = vld [vmem:[%s1542 + $0x18] sm:$0xf]
        %v1550 = vld [vmem:[%s1542 + $0x1c] sm:$0xf]
        %v1551 = vld [vmem:[%s1542 + $0x20] sm:$0xf]
        %v1552 = vld [vmem:[%s1542 + $0x24] sm:$0xf]
        %v1553 = vld [vmem:[%s1542 + $0x28] sm:$0xf]
        %v1554 = vld [vmem:[%s1542 + $0x2c] sm:$0xf]
        %v1555 = vld [vmem:[%s1542 + $0x30] sm:$0xf]
        %v1556 = vld [vmem:[%s1542 + $0x34] sm:$0xf]
        %v1557 = vld [vmem:[%s1542 + $0x38] sm:$0xf]
        %v1558 = vld [vmem:[%s1542 + $0x3c] sm:$0xf]
        %v1559 = vunpack.c.l.b16 %v1541
        %v1560 = vpack.c.b16 %v1199, %v1198
        %v1561 = vpack.c.b16 %v1201, %v1200
        %v1562 = vpack.c.b16 %v1203, %v1202
        %v1563 = vpack.c.b16 %v1559, %v1204
        %v1584 = vunpack.c.l.b16 %v1543
        %v1585 = vunpack.c.l.b16 %v1544
        %v1586 = vunpack.c.l.b16 %v1545
        %v1587 = vunpack.c.l.b16 %v1546
        %v1588 = vunpack.c.l.b16 %v1547
        %v1589 = vunpack.c.l.b16 %v1548
        %v1590 = vunpack.c.l.b16 %v1549
        %v1591 = vunpack.c.l.b16 %v1550
        %v1592 = vunpack.c.l.b16 %v1551
        %v1593 = vunpack.c.l.b16 %v1552
        %v1594 = vunpack.c.l.b16 %v1553
        %v1595 = vunpack.c.l.b16 %v1554
        %v1596 = vunpack.c.l.b16 %v1555
        %v1597 = vunpack.c.l.b16 %v1556
        %v1598 = vunpack.c.l.b16 %v1557
        %v1599 = vunpack.c.l.b16 %v1558
        %v1600 = vpack.c.b16 %v1585, %v1584
        %v1601 = vpack.c.b16 %v1587, %v1586
        %v1602 = vpack.c.b16 %v1589, %v1588
        %v1603 = vpack.c.b16 %v1591, %v1590
        %v1604 = vpack.c.b16 %v1593, %v1592
        %v1605 = vpack.c.b16 %v1595, %v1594
        %v1606 = vpack.c.b16 %v1597, %v1596
        %v1607 = vpack.c.b16 %v1599, %v1598
        %1616 = vmatpush.bf16.msra.mxu0 %v1607
        %1617 = vmatpush.bf16.msra.mxu0 %v1606
        %1618 = vmatpush.bf16.msra.mxu0 %v1605
        %1619 = vmatpush.bf16.msra.mxu0 %v1604
        %1620 = vmatpush.bf16.msra.mxu0 %v1603
        %1621 = vmatpush.bf16.msra.mxu0 %v1602
        %1622 = vmatpush.bf16.msra.mxu0 %v1601
        %1623 = vmatpush.bf16.msra.mxu0 %v1600
        %1624 = vmatmul.bf16.gmra.mxu0 %v1560
        %v1625 = vpop.f32.mrf.mxu0
        %v1626 = vadd.f32 0.0, %v1625
        %v1627 = vpop.f32.mrf.mxu0
        %v1628 = vadd.f32 0.0, %v1627
        %1629 = vmatmul.bf16.gmra.mxu0 %v1561
        %v1630 = vpop.f32.mrf.mxu0
        %v1631 = vadd.f32 0.0, %v1630
        %v1632 = vpop.f32.mrf.mxu0
        %v1633 = vadd.f32 0.0, %v1632
        %1634 = vmatmul.bf16.gmra.mxu0 %v1562
        %v1635 = vpop.f32.mrf.mxu0
        %v1636 = vadd.f32 0.0, %v1635
        %v1637 = vpop.f32.mrf.mxu0
        %v1638 = vadd.f32 0.0, %v1637
        %1639 = vmatmul.bf16.gmra.mxu0 %v1563
        %v1640 = vpop.f32.mrf.mxu0
        %v1641 = vadd.f32 0.0, %v1640
        %v1642 = vpop.f32.mrf.mxu0
        %v1643 = vadd.f32 0.0, %v1642
        %1644 = vdwg.mxu0
        %v1645 = vadd.f32 %v1530, %v1626
        %v1646 = vadd.f32 %v1531, %v1628
        %v1647 = vadd.f32 %v1532, %v1631
        %v1648 = vadd.f32 %v1533, %v1633
        %v1649 = vadd.f32 %v1534, %v1636
        %v1650 = vadd.f32 %v1535, %v1638
        %v1651 = vadd.f32 %v1536, %v1641
        %v1652 = vadd.f32 %v1537, %v1643
        %s1653 = scalar_lea.vmem %s1, 384
        %v1654 = vld [vmem:[%s1653] sm:$0xf]
        %v1655 = vld [vmem:[%s1653 + $0x4] sm:$0xf]
        %v1656 = vld [vmem:[%s1653 + $0x8] sm:$0xf]
        %v1657 = vld [vmem:[%s1653 + $0xc] sm:$0xf]
        %v1658 = vld [vmem:[%s1653 + $0x10] sm:$0xf]
        %v1659 = vld [vmem:[%s1653 + $0x14] sm:$0xf]
        %v1660 = vld [vmem:[%s1653 + $0x18] sm:$0xf]
        %v1661 = vld [vmem:[%s1653 + $0x1c] sm:$0xf]
        %v1662 = vld [vmem:[%s1653 + $0x20] sm:$0xf]
        %v1663 = vld [vmem:[%s1653 + $0x24] sm:$0xf]
        %v1664 = vld [vmem:[%s1653 + $0x28] sm:$0xf]
        %v1665 = vld [vmem:[%s1653 + $0x2c] sm:$0xf]
        %v1666 = vld [vmem:[%s1653 + $0x30] sm:$0xf]
        %v1667 = vld [vmem:[%s1653 + $0x34] sm:$0xf]
        %v1668 = vld [vmem:[%s1653 + $0x38] sm:$0xf]
        %v1669 = vld [vmem:[%s1653 + $0x3c] sm:$0xf]
        %v1670 = vpack.c.b16 %v803, %v1316
        %v1688 = vunpack.c.l.b16 %v1654
        %v1689 = vunpack.c.l.b16 %v1655
        %v1690 = vunpack.c.l.b16 %v1656
        %v1691 = vunpack.c.l.b16 %v1657
        %v1692 = vunpack.c.l.b16 %v1658
        %v1693 = vunpack.c.l.b16 %v1659
        %v1694 = vunpack.c.l.b16 %v1660
        %v1695 = vunpack.c.l.b16 %v1661
        %v1696 = vunpack.c.l.b16 %v1662
        %v1697 = vunpack.c.l.b16 %v1663
        %v1698 = vunpack.c.l.b16 %v1664
        %v1699 = vunpack.c.l.b16 %v1665
        %v1700 = vunpack.c.l.b16 %v1666
        %v1701 = vunpack.c.l.b16 %v1667
        %v1702 = vunpack.c.l.b16 %v1668
        %v1703 = vunpack.c.l.b16 %v1669
        %v1704 = vpack.c.b16 %v1689, %v1688
        %v1705 = vpack.c.b16 %v1691, %v1690
        %v1706 = vpack.c.b16 %v1693, %v1692
        %v1707 = vpack.c.b16 %v1695, %v1694
        %v1708 = vpack.c.b16 %v1697, %v1696
        %v1709 = vpack.c.b16 %v1699, %v1698
        %v1710 = vpack.c.b16 %v1701, %v1700
        %v1711 = vpack.c.b16 %v1703, %v1702
        %1720 = vmatpush.bf16.msra.mxu0 %v1711
        %1721 = vmatpush.bf16.msra.mxu0 %v1710
        %1722 = vmatpush.bf16.msra.mxu0 %v1709
        %1723 = vmatpush.bf16.msra.mxu0 %v1708
        %1724 = vmatpush.bf16.msra.mxu0 %v1707
        %1725 = vmatpush.bf16.msra.mxu0 %v1706
        %1726 = vmatpush.bf16.msra.mxu0 %v1705
        %1727 = vmatpush.bf16.msra.mxu0 %v1704
        %1728 = vmatmul.bf16.gmra.mxu0 %v1061
        %v1729 = vpop.f32.mrf.mxu0
        %v1730 = vadd.f32 0.0, %v1729
        %v1731 = vpop.f32.mrf.mxu0
        %v1732 = vadd.f32 0.0, %v1731
        %1733 = vmatmul.bf16.gmra.mxu0 %v1062
        %v1734 = vpop.f32.mrf.mxu0
        %v1735 = vadd.f32 0.0, %v1734
        %v1736 = vpop.f32.mrf.mxu0
        %v1737 = vadd.f32 0.0, %v1736
        %1738 = vmatmul.bf16.gmra.mxu0 %v1063
        %v1739 = vpop.f32.mrf.mxu0
        %v1740 = vadd.f32 0.0, %v1739
        %v1741 = vpop.f32.mrf.mxu0
        %v1742 = vadd.f32 0.0, %v1741
        %1743 = vmatmul.bf16.gmra.mxu0 %v1670
        %v1744 = vpop.f32.mrf.mxu0
        %v1745 = vadd.f32 0.0, %v1744
        %v1746 = vpop.f32.mrf.mxu0
        %v1747 = vadd.f32 0.0, %v1746
        %1748 = vdwg.mxu0
        %v1749 = vadd.f32 %v1645, %v1730
        %v1750 = vadd.f32 %v1646, %v1732
        %v1751 = vadd.f32 %v1647, %v1735
        %v1752 = vadd.f32 %v1648, %v1737
        %v1753 = vadd.f32 %v1649, %v1740
        %v1754 = vadd.f32 %v1650, %v1742
        %v1755 = vadd.f32 %v1651, %v1745
        %v1756 = vadd.f32 %v1652, %v1747
        %s1757 = scalar_lea.vmem %s1, 448
        %v1758 = vld [vmem:[%s1757] sm:$0xf]
        %v1759 = vld [vmem:[%s1757 + $0x4] sm:$0xf]
        %v1760 = vld [vmem:[%s1757 + $0x8] sm:$0xf]
        %v1761 = vld [vmem:[%s1757 + $0xc] sm:$0xf]
        %v1762 = vld [vmem:[%s1757 + $0x10] sm:$0xf]
        %v1763 = vld [vmem:[%s1757 + $0x14] sm:$0xf]
        %v1764 = vld [vmem:[%s1757 + $0x18] sm:$0xf]
        %v1765 = vld [vmem:[%s1757 + $0x1c] sm:$0xf]
        %v1766 = vld [vmem:[%s1757 + $0x20] sm:$0xf]
        %v1767 = vld [vmem:[%s1757 + $0x24] sm:$0xf]
        %v1768 = vld [vmem:[%s1757 + $0x28] sm:$0xf]
        %v1769 = vld [vmem:[%s1757 + $0x2c] sm:$0xf]
        %v1770 = vld [vmem:[%s1757 + $0x30] sm:$0xf]
        %v1771 = vld [vmem:[%s1757 + $0x34] sm:$0xf]
        %v1772 = vld [vmem:[%s1757 + $0x38] sm:$0xf]
        %v1773 = vld [vmem:[%s1757 + $0x3c] sm:$0xf]
        %v1774 = vpack.c.b16 %v967, %v1444
        %v1792 = vunpack.c.l.b16 %v1758
        %v1793 = vunpack.c.l.b16 %v1759
        %v1794 = vunpack.c.l.b16 %v1760
        %v1795 = vunpack.c.l.b16 %v1761
        %v1796 = vunpack.c.l.b16 %v1762
        %v1797 = vunpack.c.l.b16 %v1763
        %v1798 = vunpack.c.l.b16 %v1764
        %v1799 = vunpack.c.l.b16 %v1765
        %v1800 = vunpack.c.l.b16 %v1766
        %v1801 = vunpack.c.l.b16 %v1767
        %v1802 = vunpack.c.l.b16 %v1768
        %v1803 = vunpack.c.l.b16 %v1769
        %v1804 = vunpack.c.l.b16 %v1770
        %v1805 = vunpack.c.l.b16 %v1771
        %v1806 = vunpack.c.l.b16 %v1772
        %v1807 = vunpack.c.l.b16 %v1773
        %v1808 = vpack.c.b16 %v1793, %v1792
        %v1809 = vpack.c.b16 %v1795, %v1794
        %v1810 = vpack.c.b16 %v1797, %v1796
        %v1811 = vpack.c.b16 %v1799, %v1798
        %v1812 = vpack.c.b16 %v1801, %v1800
        %v1813 = vpack.c.b16 %v1803, %v1802
        %v1814 = vpack.c.b16 %v1805, %v1804
        %v1815 = vpack.c.b16 %v1807, %v1806
        %1824 = vmatpush.bf16.msra.mxu0 %v1815
        %1825 = vmatpush.bf16.msra.mxu0 %v1814
        %1826 = vmatpush.bf16.msra.mxu0 %v1813
        %1827 = vmatpush.bf16.msra.mxu0 %v1812
        %1828 = vmatpush.bf16.msra.mxu0 %v1811
        %1829 = vmatpush.bf16.msra.mxu0 %v1810
        %1830 = vmatpush.bf16.msra.mxu0 %v1809
        %1831 = vmatpush.bf16.msra.mxu0 %v1808
        %1832 = vmatmul.bf16.gmra.mxu0 %v976
        %v1833 = vpop.f32.mrf.mxu0
        %v1834 = vadd.f32 0.0, %v1833
        %v1835 = vpop.f32.mrf.mxu0
        %v1836 = vadd.f32 0.0, %v1835
        %1837 = vmatmul.bf16.gmra.mxu0 %v977
        %v1838 = vpop.f32.mrf.mxu0
        %v1839 = vadd.f32 0.0, %v1838
        %v1840 = vpop.f32.mrf.mxu0
        %v1841 = vadd.f32 0.0, %v1840
        %1842 = vmatmul.bf16.gmra.mxu0 %v978
        %v1843 = vpop.f32.mrf.mxu0
        %v1844 = vadd.f32 0.0, %v1843
        %v1845 = vpop.f32.mrf.mxu0
        %v1846 = vadd.f32 0.0, %v1845
        %1847 = vmatmul.bf16.gmra.mxu0 %v1774
        %v1848 = vpop.f32.mrf.mxu0
        %v1849 = vadd.f32 0.0, %v1848
        %v1850 = vpop.f32.mrf.mxu0
        %v1851 = vadd.f32 0.0, %v1850
        %1852 = vdwg.mxu0
        %v1853 = vadd.f32 %v1749, %v1834
        %v1854 = vadd.f32 %v1750, %v1836
        %v1855 = vadd.f32 %v1751, %v1839
        %v1856 = vadd.f32 %v1752, %v1841
        %v1857 = vadd.f32 %v1753, %v1844
        %v1858 = vadd.f32 %v1754, %v1846
        %v1859 = vadd.f32 %v1755, %v1849
        %v1860 = vadd.f32 %v1756, %v1851
        %s1861 = scalar_lea.vmem %s1, 512
        %v1862 = vld [vmem:[%s1861] sm:$0xf]
        %v1863 = vld [vmem:[%s1861 + $0x4] sm:$0xf]
        %v1864 = vld [vmem:[%s1861 + $0x8] sm:$0xf]
        %v1865 = vld [vmem:[%s1861 + $0xc] sm:$0xf]
        %v1866 = vld [vmem:[%s1861 + $0x10] sm:$0xf]
        %v1867 = vld [vmem:[%s1861 + $0x14] sm:$0xf]
        %v1868 = vld [vmem:[%s1861 + $0x18] sm:$0xf]
        %v1869 = vld [vmem:[%s1861 + $0x1c] sm:$0xf]
        %v1870 = vld [vmem:[%s1861 + $0x20] sm:$0xf]
        %v1871 = vld [vmem:[%s1861 + $0x24] sm:$0xf]
        %v1872 = vld [vmem:[%s1861 + $0x28] sm:$0xf]
        %v1873 = vld [vmem:[%s1861 + $0x2c] sm:$0xf]
        %v1874 = vld [vmem:[%s1861 + $0x30] sm:$0xf]
        %v1875 = vld [vmem:[%s1861 + $0x34] sm:$0xf]
        %v1876 = vld [vmem:[%s1861 + $0x38] sm:$0xf]
        %v1877 = vld [vmem:[%s1861 + $0x3c] sm:$0xf]
        %v1878 = vpack.c.b16 %v1197, %v1559
        %v1896 = vunpack.c.l.b16 %v1862
        %v1897 = vunpack.c.l.b16 %v1863
        %v1898 = vunpack.c.l.b16 %v1864
        %v1899 = vunpack.c.l.b16 %v1865
        %v1900 = vunpack.c.l.b16 %v1866
        %v1901 = vunpack.c.l.b16 %v1867
        %v1902 = vunpack.c.l.b16 %v1868
        %v1903 = vunpack.c.l.b16 %v1869
        %v1904 = vunpack.c.l.b16 %v1870
        %v1905 = vunpack.c.l.b16 %v1871
        %v1906 = vunpack.c.l.b16 %v1872
        %v1907 = vunpack.c.l.b16 %v1873
        %v1908 = vunpack.c.l.b16 %v1874
        %v1909 = vunpack.c.l.b16 %v1875
        %v1910 = vunpack.c.l.b16 %v1876
        %v1911 = vunpack.c.l.b16 %v1877
        %v1912 = vpack.c.b16 %v1897, %v1896
        %v1913 = vpack.c.b16 %v1899, %v1898
        %v1914 = vpack.c.b16 %v1901, %v1900
        %v1915 = vpack.c.b16 %v1903, %v1902
        %v1916 = vpack.c.b16 %v1905, %v1904
        %v1917 = vpack.c.b16 %v1907, %v1906
        %v1918 = vpack.c.b16 %v1909, %v1908
        %v1919 = vpack.c.b16 %v1911, %v1910
        %1928 = vmatpush.bf16.msra.mxu0 %v1919
        %1929 = vmatpush.bf16.msra.mxu0 %v1918
        %1930 = vmatpush.bf16.msra.mxu0 %v1917
        %1931 = vmatpush.bf16.msra.mxu0 %v1916
        %1932 = vmatpush.bf16.msra.mxu0 %v1915
        %1933 = vmatpush.bf16.msra.mxu0 %v1914
        %1934 = vmatpush.bf16.msra.mxu0 %v1913
        %1935 = vmatpush.bf16.msra.mxu0 %v1912
        %1936 = vmatmul.bf16.gmra.mxu0 %v1206
        %v1937 = vpop.f32.mrf.mxu0
        %v1938 = vadd.f32 0.0, %v1937
        %v1939 = vpop.f32.mrf.mxu0
        %v1940 = vadd.f32 0.0, %v1939
        %1941 = vmatmul.bf16.gmra.mxu0 %v1207
        %v1942 = vpop.f32.mrf.mxu0
        %v1943 = vadd.f32 0.0, %v1942
        %v1944 = vpop.f32.mrf.mxu0
        %v1945 = vadd.f32 0.0, %v1944
        %1946 = vmatmul.bf16.gmra.mxu0 %v1208
        %v1947 = vpop.f32.mrf.mxu0
        %v1948 = vadd.f32 0.0, %v1947
        %v1949 = vpop.f32.mrf.mxu0
        %v1950 = vadd.f32 0.0, %v1949
        %1951 = vmatmul.bf16.gmra.mxu0 %v1878
        %v1952 = vpop.f32.mrf.mxu0
        %v1953 = vadd.f32 0.0, %v1952
        %v1954 = vpop.f32.mrf.mxu0
        %v1955 = vadd.f32 0.0, %v1954
        %1956 = vdwg.mxu0
        %v1957 = vadd.f32 %v1853, %v1938
        %v1958 = vadd.f32 %v1854, %v1940
        %v1959 = vadd.f32 %v1855, %v1943
        %v1960 = vadd.f32 %v1856, %v1945
        %v1961 = vadd.f32 %v1857, %v1948
        %v1962 = vadd.f32 %v1858, %v1950
        %v1963 = vadd.f32 %v1859, %v1953
        %v1964 = vadd.f32 %v1860, %v1955
        %v1965 = vld [vmem:[%s2] sm:$0x1]
        %v1967 = vperm.slane %v1965, 0
        %v1969 = vadd.f32 %v1957, %v1967
        %v1970 = vadd.f32 %v1958, %v1967
        %v1971 = vadd.f32 %v1959, %v1967
        %v1972 = vadd.f32 %v1960, %v1967
        %v1973 = vadd.f32 %v1961, %v1967
        %v1974 = vadd.f32 %v1962, %v1967
        %v1975 = vadd.f32 %v1963, %v1967
        %v1976 = vadd.f32 %v1964, %v1967
        %v1977 = vmax.f32 %v1969, 0.0
        %v1978 = vmax.f32 %v1970, 0.0
        %v1979 = vmax.f32 %v1971, 0.0
        %v1980 = vmax.f32 %v1972, 0.0
        %v1981 = vmax.f32 %v1973, 0.0
        %v1982 = vmax.f32 %v1974, 0.0
        %v1983 = vmax.f32 %v1975, 0.0
        %v1984 = vmax.f32 %v1976, 0.0
        %v1985 = vadd.f32 %v1977, %v1978
        %v1986 = vadd.f32 %v1985, %v1979
        %v1987 = vadd.f32 %v1986, %v1980
        %v1988 = vadd.f32 %v1987, %v1981
        %v1989 = vadd.f32 %v1988, %v1982
        %v1990 = vadd.f32 %v1989, %v1983
        %v1991 = vadd.f32 %v1990, %v1984
        %v1992 = vrot.slane %v1991, 4
        %v1993 = vadd.f32 %v1991, %v1992
        %v1994 = vrot.slane %v1993, 2
        %v1995 = vadd.f32 %v1993, %v1994
        %v1996 = vrot.slane %v1995, 1
        %v1997 = vadd.f32 %v1995, %v1996
        %v1998 = vmul.f32 %v1997, 0.015625
        %v1999 = vld [vmem:[%s3] sm:$0xff]
        %v2000 = vld [vmem:[%s3 + $0x8] sm:$0xff]
        %v2001 = vld [vmem:[%s3 + $0x10] sm:$0xff]
        %v2002 = vld [vmem:[%s3 + $0x18] sm:$0xff]
        %v2003 = vld [vmem:[%s3 + $0x20] sm:$0xff]
        %v2004 = vld [vmem:[%s3 + $0x28] sm:$0xff]
        %v2005 = vld [vmem:[%s3 + $0x30] sm:$0xff]
        %v2006 = vld [vmem:[%s3 + $0x38] sm:$0xff]
        %v2007 = vld [vmem:[%s3 + $0x40] sm:$0xff]
        %v2008 = vld [vmem:[%s3 + $0x48] sm:$0xff]
        %v2009 = vld [vmem:[%s3 + $0x50] sm:$0xff]
        %v2010 = vld [vmem:[%s3 + $0x58] sm:$0xff]
        %v2011 = vld [vmem:[%s3 + $0x60] sm:$0xff]
        %v2012 = vld [vmem:[%s3 + $0x68] sm:$0xff]
        %v2013 = vld [vmem:[%s3 + $0x70] sm:$0xff]
        %v2014 = vld [vmem:[%s3 + $0x78] sm:$0xff]
        %v2015 = vld [vmem:[%s4] sm:$0x1]
        %2016 = vmatpush.msra.mxu0 %v2014
        %2017 = vmatpush.msra.mxu0 %v2013
        %2018 = vmatpush.msra.mxu0 %v2012
        %2019 = vmatpush.msra.mxu0 %v2011
        %2020 = vmatpush.msra.mxu0 %v2010
        %2021 = vmatpush.msra.mxu0 %v2009
        %2022 = vmatpush.msra.mxu0 %v2008
        %2023 = vmatpush.msra.mxu0 %v2007
        %2024 = vmatpush.msra.mxu0 %v2006
        %2025 = vmatpush.msra.mxu0 %v2005
        %2026 = vmatpush.msra.mxu0 %v2004
        %2027 = vmatpush.msra.mxu0 %v2003
        %2028 = vmatpush.msra.mxu0 %v2002
        %2029 = vmatpush.msra.mxu0 %v2001
        %2030 = vmatpush.msra.mxu0 %v2000
        %2031 = vmatpush.msra.mxu0 %v1999
        %2032 = vmatmul.f32.gmra.mxu0 %v1998
        %v2033 = vpop.f32.mrf.mxu0
        %v2034 = vadd.f32 %v2015, %v2033
        %2035 = vdwg.mxu0
        %vm2036 = vcmask 253952
        %2037 = vst.msk [vmem:[%s216] sm:$0x1] %vm2036, %v2034
        %s2038 = sand.u32 %s137, 1
        %s2039 = scalar_lea.sflag [#allocation3], %s2038
        %s2040 = sand.u32 %s137, 1
        %s2041 = scalar_lea.vmem [#allocation2], %s2040
        // Predicated region
        $region41: #{vision_encoder_forward.3} parent=39 // pred_check
          %p2042 = pneg %p147
        $region42: #{vision_encoder_forward.3} parent=39 // pred_check_branch
          %2044 = sbr.rel (%p2042) target = $region44
        $region43: #{vision_encoder_forward.3} parent=39 // pred_region
          %2046 = vsyncadd %s2039, 0
          %s2047 = scalar_lea.hbm %s5, %s19
          %s2049 = sshll.u32 %s2041, 4
          %s2050 = int_to_ptr.vmem [resolvable:$true] %s2049
          %s2051 = sshll.u32 %s2047, 4
          %s2052 = int_to_ptr.hbm [resolvable:$true] %s2051
          %2054 = dma.vmem_to_hbm [thread:$0]  %s2050, 16, %s2052, %s2039
        $region44: #{vision_encoder_forward.3} parent=39 // pred_fallthru
          _
      $region40: #{vision_encoder_forward.3} parent=5 // pred_fallthru
        _
      %p2055 = scmp.le.s32.totalorder 2, %s14
      // Predicated region
      $region45: #{vision_encoder_forward.3} parent=5 // pred_check
        %p2056 = pneg %p2055
      $region46: #{vision_encoder_forward.3} parent=5 // pred_check_branch
        %2058 = sbr.rel (%p2056) target = $region48
      $region47: #{vision_encoder_forward.3} parent=5 // pred_region
        %s2059 = ssub.s32 %s14, 2
        // Predicated region
        $region49: #{vision_encoder_forward.3} parent=47 // pred_check
          %p2060 = pneg %p153
        $region50: #{vision_encoder_forward.3} parent=47 // pred_check_branch
          %2062 = sbr.rel (%p2060) target = $region52
        $region51: #{vision_encoder_forward.3} parent=47 // pred_region
          %s2063 = sand.u32 %s138, 1
          %s2064 = scalar_lea.sflag [#allocation3], %s2063
          %s2065 = sand.u32 %s138, 1
          %s2066 = scalar_lea.vmem [#allocation2], %s2065
          %2068 = dma.done %s2064, 16
        $region52: #{vision_encoder_forward.3} parent=47 // pred_fallthru
          _
      $region48: #{vision_encoder_forward.3} parent=5 // pred_fallthru
        _
    $region6: #{vision_encoder_forward.3} parent=1 // loop_footer
      %s18 = sadd.s32 1, %s14
    $region7: #{vision_encoder_forward.3} parent=1 // loop_footer_branch
      %13 = sbr.rel target = $region3
    $region8: #{vision_encoder_forward.3} parent=1 // loop_exit
      _
    %2069 = vsyncpa [#allocation3], 1
    %s2070 = scalar_lea.sflag [#allocation3], 1
    %2071 = vsyncpa %s2070, 1

</llo_original>
